<compile_context>
chip_gen: v7x
topology: tpu7x:2x2x1
jax: 0.10.0
libtpu: 0.0.40
codegen_flags: <defaults>
</compile_context>

<pallas_src>
import functools

import jax
import jax.numpy as jnp
from jax import lax
from jax.experimental import pallas as pl
from jax.experimental.pallas import tpu as pltpu


_CONV_CFG = ((32, 8, 4), (64, 4, 2), (64, 3, 1))   # (Cout, kernel, stride)
_FC1 = 512                                          # fc1 hidden width
_N_PAD = 128                                        # lane-dense fc2 output
_SUBLANE = 8                                        # f32 sublane tile


def _conv_shapes(input_shape):
    """Per conv layer: (Cin, Hin, Win, Cout, k, stride, Hout, Wout)."""
    cin, h, w = input_shape
    shapes = []
    for cout, k, s in _CONV_CFG:
        ho, wo = (h - k) // s + 1, (w - k) // s + 1
        shapes.append((cin, h, w, cout, k, s, ho, wo))
        cin, h, w = cout, ho, wo
    return tuple(shapes)


def _bias_layout():
    """128-aligned lane offsets of the 5 biases inside the packed bias slab."""
    widths = (_CONV_CFG[0][0], _CONV_CFG[1][0], _CONV_CFG[2][0], _FC1, _N_PAD)
    offs, off = [], 0
    for w in widths:
        offs.append(off)
        off += ((w + _N_PAD - 1) // _N_PAD) * _N_PAD
    return tuple(offs), off


# ---------------------------------------------------------------------------
# Fused Pallas kernel: conv1 + conv2 + conv3 + fc1 + fc2, all VMEM-resident.
# Processes one batch block of `bb` rows (bb a multiple of 8) per grid step.
# ---------------------------------------------------------------------------
def _dqn_fused_kernel(cols1_ref, wpack_ref, wf1_ref, bias_ref, out_ref, *,
                      bb, shapes):
    f32 = jnp.float32
    (c1, _, _, co1, k1, _, ho1, wo1) = shapes[0]
    (_, _, _, co2, k2, s2, ho2, wo2) = shapes[1]
    (_, _, _, co3, k3, _, _, _) = shapes[2]
    cdt = wpack_ref.dtype                       # matmul operand dtype (bf16/f32)
    (ob1, ob2, ob3, obf1, obf2), _ = _bias_layout()

    # Static slices out of the packed weight slab: row offsets are multiples
    # of 8 and lane slices start at 0 — cheap subview loads, one DMA for all.
    r1, r2, r3 = k1 * k1 * c1, k2 * k2 * co1, k3 * k3 * co2
    w1 = wpack_ref[0:r1, 0:co1]
    w2 = wpack_ref[r1:r1 + r2, 0:co2]
    w3 = wpack_ref[r1 + r2:r1 + r2 + r3, 0:co3]
    wf2 = wpack_ref[r1 + r2 + r3:r1 + r2 + r3 + _FC1, :]        # (512, 128)

    # Packed biases, each at a 128-aligned lane offset (f32: added to f32 acc).
    b1 = bias_ref[:, ob1:ob1 + co1]
    b2 = bias_ref[:, ob2:ob2 + co2]
    b3 = bias_ref[:, ob3:ob3 + co3]
    bf1 = bias_ref[:, obf1:obf1 + _FC1]
    bf2 = bias_ref[:, obf2:obf2 + _N_PAD]

    # ---- conv1: one im2col matmul, M = Ho1*Wo1*bb (512 here: good MXU fill).
    a1 = jnp.dot(cols1_ref[...], w1, preferred_element_type=f32)
    a1 = jnp.maximum(a1 + b1, 0.0)              # rows ordered (h, w, b), f32

    # Per conv1 output position p = h*Wo1 + w: an aligned (bb, Cout1) sublane
    # block (bb is a multiple of 8 -> no misaligned sublane extracts).
    h1 = [a1[p * bb:(p + 1) * bb, :] for p in range(ho1 * wo1)]

    # ---- conv2: ONE patch matrix for all Ho2*Wo2 output positions and a
    # single matmul + bias + ReLU (instead of 9 tiny matmuls).  Rows ordered
    # (oh, ow, b); features ordered (kh, kw, cin) to match the packed weight.
    x2 = jnp.concatenate(
        [jnp.concatenate(
            [h1[(s2 * oh + i) * wo1 + (s2 * ow + j)]
             for i in range(k2) for j in range(k2)], axis=-1)
         for oh in range(ho2) for ow in range(wo2)],
        axis=0)                                 # (Ho2*Wo2*bb, k2*k2*Cout1)
    a2 = jnp.dot(x2.astype(cdt), w2, preferred_element_type=f32)
    a2 = jnp.maximum(a2 + b2, 0.0)              # (Ho2*Wo2*bb, Cout2)

    # ---- conv3: its output is 1x1 spatial here, so its single im2col row is
    # the (kh, kw, cin)-ordered concat of every conv2 output-position block.
    # TODO(synk): generalize to >1x1 conv3 outputs (e.g. 84x84 Atari inputs):
    # unroll conv3 like conv2 and permute fc1 columns for the NCHW flatten.
    x3 = jnp.concatenate(
        [a2[p * bb:(p + 1) * bb, :] for p in range(ho2 * wo2)], axis=-1)
    a3 = jnp.dot(x3.astype(cdt), w3, preferred_element_type=f32)
    a3 = jnp.maximum(a3 + b3, 0.0)              # (bb, Cout3)

    # ---- fc1 + ReLU
    a4 = jnp.dot(a3.astype(cdt), wf1_ref[...], preferred_element_type=f32)
    a4 = jnp.maximum(a4 + bf1, 0.0)             # (bb, 512)

    # ---- fc2, lane-dense (128 zero-padded columns -> unmasked full store).
    q = jnp.dot(a4.astype(cdt), wf2, preferred_element_type=f32) + bf2
    out_ref[...] = q.astype(out_ref.dtype)


def build_forward(input_shape, n_actions, batch, *,
                  compute_dtype=jnp.bfloat16, batch_block=None):
    """Builds the fused forward.  `batch_block` (multiple of 8, divides the
    padded batch) splits the batch over a "parallel" grid axis — on v7x pass
    e.g. padded_batch//2 so each TensorCore takes half; leave None otherwise."""
    shapes = _conv_shapes(input_shape)
    c1, _, _, co1, k1, s1, ho1, wo1 = shapes[0]
    _, _, _, co2, k2, _, ho2, wo2 = shapes[1]
    _, _, _, co3, k3, _, ho3, wo3 = shapes[2]
    assert ho3 == 1 and wo3 == 1, (
        "fused kernel is specialized to a 1x1 conv3 output")
    assert n_actions <= _N_PAD

    # Pad batch up to the f32 sublane tile so every in-kernel block slice is
    # sublane-aligned and the output store is unmasked.
    b_pad = max(_SUBLANE, ((batch + _SUBLANE - 1) // _SUBLANE) * _SUBLANE)
    bb = b_pad if batch_block is None else batch_block
    assert bb % _SUBLANE == 0 and b_pad % bb == 0
    nc = b_pad // bb                            # grid steps over batch chunks
    kfeat = k1 * k1 * c1

    kernel = functools.partial(_dqn_fused_kernel, bb=bb, shapes=shapes)

    # Advisory cost for XLA scheduling of the small custom call.
    flops = 2 * nc * (ho1 * wo1 * bb * kfeat * co1
                      + ho2 * wo2 * bb * (k2 * k2 * co1) * co2
                      + bb * (k3 * k3 * co2) * co3
                      + bb * co3 * _FC1
                      + bb * _FC1 * _N_PAD)

    def forward(kparams, x):
        # conv1 im2col glue (the only per-forward XLA work): transpose ONCE to
        # (H, W, B, Cin) BEFORE the k1*k1 strided slices, so the concat already
        # yields (Ho1, Wo1, B, K1) and no second transpose is needed.
        x = x.astype(compute_dtype)
        if b_pad != batch:
            x = jnp.pad(x, ((0, b_pad - batch), (0, 0), (0, 0), (0, 0)))
        x_t = jnp.transpose(x, (2, 3, 0, 1))                  # (H, W, B, Cin)
        patches = [
            x_t[i:i + s1 * (ho1 - 1) + 1:s1, j:j + s1 * (wo1 - 1) + 1:s1]
            for i in range(k1) for j in range(k1)
        ]
        cols = jnp.concatenate(patches, axis=-1)              # (Ho1,Wo1,B,K1)
        if nc > 1:                                            # chunk-major rows
            cols = cols.reshape(ho1, wo1, nc, bb, kfeat).transpose(2, 0, 1, 3, 4)
        cols1 = cols.reshape(nc * ho1 * wo1 * bb, kfeat)

        args = (cols1, kparams["wpack"], kparams["wf1"], kparams["bias"])
        bytes_accessed = (sum(int(a.size) * a.dtype.itemsize for a in args)
                          + b_pad * _N_PAD * 4)
        q_pad = pl.pallas_call(
            kernel,
            grid=(nc,),
            out_shape=jax.ShapeDtypeStruct((b_pad, _N_PAD), jnp.float32),
            in_specs=[
                pl.BlockSpec((ho1 * wo1 * bb, kfeat), lambda i: (i, 0)),
                pl.BlockSpec(kparams["wpack"].shape, lambda i: (0, 0)),
                pl.BlockSpec(kparams["wf1"].shape, lambda i: (0, 0)),
                pl.BlockSpec(kparams["bias"].shape, lambda i: (0, 0)),
            ],
            out_specs=pl.BlockSpec((bb, _N_PAD), lambda i: (i, 0)),
            compiler_params=pltpu.CompilerParams(
                dimension_semantics=("parallel",)),
            cost_estimate=pl.CostEstimate(
                flops=flops, bytes_accessed=bytes_accessed, transcendentals=0),
        )(*args)
        return q_pad[:batch, :n_actions]

    return forward


# ---------------------------------------------------------------------------
# Parameters (PyTorch-style layout) + one-time kernel-friendly re-layout
# ---------------------------------------------------------------------------
def init_params(key, input_shape, n_actions):
    def uni(k, shape, fan_in):
        bound = 1.0 / jnp.sqrt(float(fan_in))
        return jax.random.uniform(k, shape, jnp.float32, -bound, bound)

    shapes = _conv_shapes(input_shape)
    conv_out = shapes[2][3] * shapes[2][6] * shapes[2][7]
    cin = input_shape[0]
    ks = jax.random.split(key, 10)
    return {
        "c1w": uni(ks[0], (32, cin, 8, 8), cin * 8 * 8),
        "c1b": uni(ks[1], (32,), cin * 8 * 8),
        "c2w": uni(ks[2], (64, 32, 4, 4), 32 * 4 * 4),
        "c2b": uni(ks[3], (64,), 32 * 4 * 4),
        "c3w": uni(ks[4], (64, 64, 3, 3), 64 * 3 * 3),
        "c3b": uni(ks[5], (64,), 64 * 3 * 3),
        "f1w": uni(ks[6], (512, conv_out), conv_out),     # (out, in) like torch
        "f1b": uni(ks[7], (512,), conv_out),
        "f2w": uni(ks[8], (n_actions, 512), 512),
        "f2b": uni(ks[9], (n_actions,), 512),
    }


def prepare_kernel_params(params, n_actions, compute_dtype=jnp.bfloat16):
    """One-time weight re-layout/packing: the jitted forward does no weight
    transposes and the kernel takes only 4 inputs (cols1, wpack, wf1, bias)."""
    def conv_mat(w):               # (Cout, Cin, kh, kw) -> (kh*kw*Cin, Cout)
        return jnp.transpose(w, (2, 3, 1, 0)).reshape(-1, w.shape[0])

    def pad_lanes(w):              # zero-pad columns to the 128-lane slab width
        return jnp.pad(w, ((0, 0), (0, _N_PAD - w.shape[1])))

    w1 = conv_mat(params["c1w"])                               # (k1^2*Cin, 32)
    w2 = conv_mat(params["c2w"])                               # (512, 64)
    w3 = conv_mat(params["c3w"])                               # (576, 64)
    wf2 = jnp.pad(params["f2w"].T, ((0, 0), (0, _N_PAD - n_actions)))
    wpack = jnp.concatenate(
        [pad_lanes(w1), pad_lanes(w2), pad_lanes(w3), wf2],
        axis=0).astype(compute_dtype)                          # (R, 128)

    offs, total = _bias_layout()
    bias = jnp.zeros((1, total), jnp.float32)                  # padded cols = 0
    for off, b in zip(offs, (params["c1b"], params["c2b"], params["c3b"],
                             params["f1b"],
                             jnp.pad(params["f2b"], (0, _N_PAD - n_actions)))):
        bias = bias.at[0, off:off + b.shape[0]].set(b)

    return {
        "wpack": wpack,
        "wf1": params["f1w"].T.astype(compute_dtype),          # (conv_out, 512)
        "bias": bias,                                          # f32
    }


# Pure-JAX reference (no Pallas) for the correctness check.
def reference_forward(params, x):
    def conv(x, w, b, s):
        y = lax.conv_general_dilated(
            x, w, (s, s), "VALID",
            dimension_numbers=("NCHW", "OIHW", "NCHW"))
        return jnp.maximum(y + b[None, :, None, None], 0.0)

    x = conv(x, params["c1w"], params["c1b"], 4)
    x = conv(x, params["c2w"], params["c2b"], 2)
    x = conv(x, params["c3w"], params["c3b"], 1)
    flat = x.reshape(x.shape[0], -1)
    h = jnp.maximum(flat @ params["f1w"].T + params["f1b"], 0.0)
    return h @ params["f2w"].T + params["f2b"]


if __name__ == "__main__":
    key = jax.random.PRNGKey(0)
    kp, kx = jax.random.split(key)

    input_shape = (4, 36, 36)   # smallest spatial size the 8/4/3 conv stack admits
    n_actions = 6
    batch = 2

    params = init_params(kp, input_shape, n_actions)
    x = jax.random.normal(kx, (batch,) + input_shape, dtype=jnp.float32)
    q_ref = reference_forward(params, x)

    # f32-operand build: closest numerical parity with the XLA reference.
    kp_f32 = prepare_kernel_params(params, n_actions, jnp.float32)
    fwd_f32 = jax.jit(build_forward(input_shape, n_actions, batch,
                                    compute_dtype=jnp.float32))
    q_f32 = jax.block_until_ready(fwd_f32(kp_f32, x))
    assert q_f32.shape == (batch, n_actions)
    assert bool(jnp.allclose(q_f32, q_ref, rtol=1e-2, atol=1e-2)), (
        "f32 Pallas output does not match JAX reference")

    # bf16-operand build (v6e/v7x perf config; f32 accumulation / elementwise).
    kp_bf16 = prepare_kernel_params(params, n_actions, jnp.bfloat16)
    fwd_bf16 = jax.jit(build_forward(input_shape, n_actions, batch,
                                     compute_dtype=jnp.bfloat16))
    q_bf16 = jax.block_until_ready(fwd_bf16(kp_bf16, x))
    assert q_bf16.shape == (batch, n_actions)
    assert bool(jnp.allclose(q_bf16, q_ref, rtol=2e-2, atol=2e-2)), (
        "bf16 Pallas output does not match JAX reference")

    print("KERNEL_OK")
</pallas_src>

<mosaic_0001>
module attributes {stable_mosaic.version = 11 : i64} {
  func.func @_dqn_fused_kernel(%arg0: i32, %arg1: memref<512x256xf32, #tpu.memory_space<vmem>>, %arg2: memref<1856x128xf32, #tpu.memory_space<vmem>>, %arg3: memref<64x512xf32, #tpu.memory_space<vmem>>, %arg4: memref<1x1024xf32, #tpu.memory_space<vmem>>, %arg5: memref<8x128xf32, #tpu.memory_space<vmem>>) attributes {dimension_semantics = [#tpu.dimension_semantics<parallel>], iteration_bounds = array<i64: 1>, scalar_prefetch = 0 : i64, scratch_operands = 0 : i64, tpu.core_type = #tpu.core_type<tc>, window_params = [{transform_indices = @transform_0, window_bounds = array<i64: 512, 256>}, {pipeline_mode = #tpu.pipeline_mode<synchronous>, transform_indices = @transform_1, window_bounds = array<i64: 1856, 128>}, {pipeline_mode = #tpu.pipeline_mode<synchronous>, transform_indices = @transform_2, window_bounds = array<i64: 64, 512>}, {pipeline_mode = #tpu.pipeline_mode<synchronous>, transform_indices = @transform_3, window_bounds = array<i64: 1, 1024>}, {transform_indices = @transform_4, window_bounds = array<i64: 8, 128>}]} {
    %c0 = arith.constant 0 : index
    %c0_0 = arith.constant 0 : index
    %0 = vector.load %arg2[%c0, %c0_0] : memref<1856x128xf32, #tpu.memory_space<vmem>>, vector<256x32xf32>
    %c256 = arith.constant 256 : index
    %c0_1 = arith.constant 0 : index
    %1 = vector.load %arg2[%c256, %c0_1] : memref<1856x128xf32, #tpu.memory_space<vmem>>, vector<512x64xf32>
    %c768 = arith.constant 768 : index
    %c0_2 = arith.constant 0 : index
    %2 = vector.load %arg2[%c768, %c0_2] : memref<1856x128xf32, #tpu.memory_space<vmem>>, vector<576x64xf32>
    %c1344 = arith.constant 1344 : index
    %c0_3 = arith.constant 0 : index
    %3 = vector.load %arg2[%c1344, %c0_3] : memref<1856x128xf32, #tpu.memory_space<vmem>>, vector<512x128xf32>
    %c0_4 = arith.constant 0 : index
    %c0_5 = arith.constant 0 : index
    %4 = vector.load %arg4[%c0_4, %c0_5] : memref<1x1024xf32, #tpu.memory_space<vmem>>, vector<1x32xf32>
    %c0_6 = arith.constant 0 : index
    %c128 = arith.constant 128 : index
    %5 = vector.load %arg4[%c0_6, %c128] : memref<1x1024xf32, #tpu.memory_space<vmem>>, vector<1x64xf32>
    %c0_7 = arith.constant 0 : index
    %c256_8 = arith.constant 256 : index
    %6 = vector.load %arg4[%c0_7, %c256_8] : memref<1x1024xf32, #tpu.memory_space<vmem>>, vector<1x64xf32>
    %c0_9 = arith.constant 0 : index
    %c384 = arith.constant 384 : index
    %7 = vector.load %arg4[%c0_9, %c384] : memref<1x1024xf32, #tpu.memory_space<vmem>>, vector<1x512xf32>
    %c0_10 = arith.constant 0 : index
    %c896 = arith.constant 896 : index
    %8 = vector.load %arg4[%c0_10, %c896] : memref<1x1024xf32, #tpu.memory_space<vmem>>, vector<1x128xf32>
    %c0_11 = arith.constant 0 : index
    %c0_12 = arith.constant 0 : index
    %9 = vector.load %arg1[%c0_11, %c0_12] : memref<512x256xf32, #tpu.memory_space<vmem>>, vector<512x256xf32>
    %cst = arith.constant dense<0.000000e+00> : vector<512x32xf32>
    %10 = tpu.matmul %9, %0, %cst {dimension_numbers = #tpu.dot_dimension_numbers<[1], [0], [0], [1], [0, 0, 1, 1], [], []>} : vector<512x256xf32>, vector<256x32xf32>, vector<512x32xf32> -> vector<512x32xf32>
    %11 = vector.broadcast %4 : vector<1x32xf32> to vector<512x32xf32>
    %12 = arith.addf %10, %11 : vector<512x32xf32>
    %cst_13 = arith.constant 0.000000e+00 : f32
    %13 = vector.broadcast %cst_13 : f32 to vector<512x32xf32>
    %14 = arith.maximumf %12, %13 : vector<512x32xf32>
    %15 = vector.extract_strided_slice %14 {offsets = [0, 0], sizes = [8, 32], strides = [1, 1]} : vector<512x32xf32> to vector<8x32xf32>
    %16 = vector.extract_strided_slice %14 {offsets = [8, 0], sizes = [8, 32], strides = [1, 1]} : vector<512x32xf32> to vector<8x32xf32>
    %17 = vector.extract_strided_slice %14 {offsets = [16, 0], sizes = [8, 32], strides = [1, 1]} : vector<512x32xf32> to vector<8x32xf32>
    %18 = vector.extract_strided_slice %14 {offsets = [24, 0], sizes = [8, 32], strides = [1, 1]} : vector<512x32xf32> to vector<8x32xf32>
    %19 = vector.extract_strided_slice %14 {offsets = [32, 0], sizes = [8, 32], strides = [1, 1]} : vector<512x32xf32> to vector<8x32xf32>
    %20 = vector.extract_strided_slice %14 {offsets = [40, 0], sizes = [8, 32], strides = [1, 1]} : vector<512x32xf32> to vector<8x32xf32>
    %21 = vector.extract_strided_slice %14 {offsets = [48, 0], sizes = [8, 32], strides = [1, 1]} : vector<512x32xf32> to vector<8x32xf32>
    %22 = vector.extract_strided_slice %14 {offsets = [56, 0], sizes = [8, 32], strides = [1, 1]} : vector<512x32xf32> to vector<8x32xf32>
    %23 = vector.extract_strided_slice %14 {offsets = [64, 0], sizes = [8, 32], strides = [1, 1]} : vector<512x32xf32> to vector<8x32xf32>
    %24 = vector.extract_strided_slice %14 {offsets = [72, 0], sizes = [8, 32], strides = [1, 1]} : vector<512x32xf32> to vector<8x32xf32>
    %25 = vector.extract_strided_slice %14 {offsets = [80, 0], sizes = [8, 32], strides = [1, 1]} : vector<512x32xf32> to vector<8x32xf32>
    %26 = vector.extract_strided_slice %14 {offsets = [88, 0], sizes = [8, 32], strides = [1, 1]} : vector<512x32xf32> to vector<8x32xf32>
    %27 = vector.extract_strided_slice %14 {offsets = [96, 0], sizes = [8, 32], strides = [1, 1]} : vector<512x32xf32> to vector<8x32xf32>
    %28 = vector.extract_strided_slice %14 {offsets = [104, 0], sizes = [8, 32], strides = [1, 1]} : vector<512x32xf32> to vector<8x32xf32>
    %29 = vector.extract_strided_slice %14 {offsets = [112, 0], sizes = [8, 32], strides = [1, 1]} : vector<512x32xf32> to vector<8x32xf32>
    %30 = vector.extract_strided_slice %14 {offsets = [120, 0], sizes = [8, 32], strides = [1, 1]} : vector<512x32xf32> to vector<8x32xf32>
    %31 = vector.extract_strided_slice %14 {offsets = [128, 0], sizes = [8, 32], strides = [1, 1]} : vector<512x32xf32> to vector<8x32xf32>
    %32 = vector.extract_strided_slice %14 {offsets = [136, 0], sizes = [8, 32], strides = [1, 1]} : vector<512x32xf32> to vector<8x32xf32>
    %33 = vector.extract_strided_slice %14 {offsets = [144, 0], sizes = [8, 32], strides = [1, 1]} : vector<512x32xf32> to vector<8x32xf32>
    %34 = vector.extract_strided_slice %14 {offsets = [152, 0], sizes = [8, 32], strides = [1, 1]} : vector<512x32xf32> to vector<8x32xf32>
    %35 = vector.extract_strided_slice %14 {offsets = [160, 0], sizes = [8, 32], strides = [1, 1]} : vector<512x32xf32> to vector<8x32xf32>
    %36 = vector.extract_strided_slice %14 {offsets = [168, 0], sizes = [8, 32], strides = [1, 1]} : vector<512x32xf32> to vector<8x32xf32>
    %37 = vector.extract_strided_slice %14 {offsets = [176, 0], sizes = [8, 32], strides = [1, 1]} : vector<512x32xf32> to vector<8x32xf32>
    %38 = vector.extract_strided_slice %14 {offsets = [184, 0], sizes = [8, 32], strides = [1, 1]} : vector<512x32xf32> to vector<8x32xf32>
    %39 = vector.extract_strided_slice %14 {offsets = [192, 0], sizes = [8, 32], strides = [1, 1]} : vector<512x32xf32> to vector<8x32xf32>
    %40 = vector.extract_strided_slice %14 {offsets = [200, 0], sizes = [8, 32], strides = [1, 1]} : vector<512x32xf32> to vector<8x32xf32>
    %41 = vector.extract_strided_slice %14 {offsets = [208, 0], sizes = [8, 32], strides = [1, 1]} : vector<512x32xf32> to vector<8x32xf32>
    %42 = vector.extract_strided_slice %14 {offsets = [216, 0], sizes = [8, 32], strides = [1, 1]} : vector<512x32xf32> to vector<8x32xf32>
    %43 = vector.extract_strided_slice %14 {offsets = [224, 0], sizes = [8, 32], strides = [1, 1]} : vector<512x32xf32> to vector<8x32xf32>
    %44 = vector.extract_strided_slice %14 {offsets = [232, 0], sizes = [8, 32], strides = [1, 1]} : vector<512x32xf32> to vector<8x32xf32>
    %45 = vector.extract_strided_slice %14 {offsets = [240, 0], sizes = [8, 32], strides = [1, 1]} : vector<512x32xf32> to vector<8x32xf32>
    %46 = vector.extract_strided_slice %14 {offsets = [248, 0], sizes = [8, 32], strides = [1, 1]} : vector<512x32xf32> to vector<8x32xf32>
    %47 = vector.extract_strided_slice %14 {offsets = [256, 0], sizes = [8, 32], strides = [1, 1]} : vector<512x32xf32> to vector<8x32xf32>
    %48 = vector.extract_strided_slice %14 {offsets = [264, 0], sizes = [8, 32], strides = [1, 1]} : vector<512x32xf32> to vector<8x32xf32>
    %49 = vector.extract_strided_slice %14 {offsets = [272, 0], sizes = [8, 32], strides = [1, 1]} : vector<512x32xf32> to vector<8x32xf32>
    %50 = vector.extract_strided_slice %14 {offsets = [280, 0], sizes = [8, 32], strides = [1, 1]} : vector<512x32xf32> to vector<8x32xf32>
    %51 = vector.extract_strided_slice %14 {offsets = [288, 0], sizes = [8, 32], strides = [1, 1]} : vector<512x32xf32> to vector<8x32xf32>
    %52 = vector.extract_strided_slice %14 {offsets = [296, 0], sizes = [8, 32], strides = [1, 1]} : vector<512x32xf32> to vector<8x32xf32>
    %53 = vector.extract_strided_slice %14 {offsets = [304, 0], sizes = [8, 32], strides = [1, 1]} : vector<512x32xf32> to vector<8x32xf32>
    %54 = vector.extract_strided_slice %14 {offsets = [312, 0], sizes = [8, 32], strides = [1, 1]} : vector<512x32xf32> to vector<8x32xf32>
    %55 = vector.extract_strided_slice %14 {offsets = [320, 0], sizes = [8, 32], strides = [1, 1]} : vector<512x32xf32> to vector<8x32xf32>
    %56 = vector.extract_strided_slice %14 {offsets = [328, 0], sizes = [8, 32], strides = [1, 1]} : vector<512x32xf32> to vector<8x32xf32>
    %57 = vector.extract_strided_slice %14 {offsets = [336, 0], sizes = [8, 32], strides = [1, 1]} : vector<512x32xf32> to vector<8x32xf32>
    %58 = vector.extract_strided_slice %14 {offsets = [344, 0], sizes = [8, 32], strides = [1, 1]} : vector<512x32xf32> to vector<8x32xf32>
    %59 = vector.extract_strided_slice %14 {offsets = [352, 0], sizes = [8, 32], strides = [1, 1]} : vector<512x32xf32> to vector<8x32xf32>
    %60 = vector.extract_strided_slice %14 {offsets = [360, 0], sizes = [8, 32], strides = [1, 1]} : vector<512x32xf32> to vector<8x32xf32>
    %61 = vector.extract_strided_slice %14 {offsets = [368, 0], sizes = [8, 32], strides = [1, 1]} : vector<512x32xf32> to vector<8x32xf32>
    %62 = vector.extract_strided_slice %14 {offsets = [376, 0], sizes = [8, 32], strides = [1, 1]} : vector<512x32xf32> to vector<8x32xf32>
    %63 = vector.extract_strided_slice %14 {offsets = [384, 0], sizes = [8, 32], strides = [1, 1]} : vector<512x32xf32> to vector<8x32xf32>
    %64 = vector.extract_strided_slice %14 {offsets = [392, 0], sizes = [8, 32], strides = [1, 1]} : vector<512x32xf32> to vector<8x32xf32>
    %65 = vector.extract_strided_slice %14 {offsets = [400, 0], sizes = [8, 32], strides = [1, 1]} : vector<512x32xf32> to vector<8x32xf32>
    %66 = vector.extract_strided_slice %14 {offsets = [408, 0], sizes = [8, 32], strides = [1, 1]} : vector<512x32xf32> to vector<8x32xf32>
    %67 = vector.extract_strided_slice %14 {offsets = [416, 0], sizes = [8, 32], strides = [1, 1]} : vector<512x32xf32> to vector<8x32xf32>
    %68 = vector.extract_strided_slice %14 {offsets = [424, 0], sizes = [8, 32], strides = [1, 1]} : vector<512x32xf32> to vector<8x32xf32>
    %69 = vector.extract_strided_slice %14 {offsets = [432, 0], sizes = [8, 32], strides = [1, 1]} : vector<512x32xf32> to vector<8x32xf32>
    %70 = vector.extract_strided_slice %14 {offsets = [440, 0], sizes = [8, 32], strides = [1, 1]} : vector<512x32xf32> to vector<8x32xf32>
    %71 = vector.extract_strided_slice %14 {offsets = [448, 0], sizes = [8, 32], strides = [1, 1]} : vector<512x32xf32> to vector<8x32xf32>
    %72 = vector.extract_strided_slice %14 {offsets = [456, 0], sizes = [8, 32], strides = [1, 1]} : vector<512x32xf32> to vector<8x32xf32>
    %73 = vector.extract_strided_slice %14 {offsets = [464, 0], sizes = [8, 32], strides = [1, 1]} : vector<512x32xf32> to vector<8x32xf32>
    %74 = vector.extract_strided_slice %14 {offsets = [472, 0], sizes = [8, 32], strides = [1, 1]} : vector<512x32xf32> to vector<8x32xf32>
    %75 = vector.extract_strided_slice %14 {offsets = [480, 0], sizes = [8, 32], strides = [1, 1]} : vector<512x32xf32> to vector<8x32xf32>
    %76 = vector.extract_strided_slice %14 {offsets = [488, 0], sizes = [8, 32], strides = [1, 1]} : vector<512x32xf32> to vector<8x32xf32>
    %77 = vector.extract_strided_slice %14 {offsets = [496, 0], sizes = [8, 32], strides = [1, 1]} : vector<512x32xf32> to vector<8x32xf32>
    %78 = vector.extract_strided_slice %14 {offsets = [504, 0], sizes = [8, 32], strides = [1, 1]} : vector<512x32xf32> to vector<8x32xf32>
    %79 = tpu.concatenate %15, %16, %17, %18, %23, %24, %25, %26, %31, %32, %33, %34, %39, %40, %41, %42 in 1 : vector<8x32xf32>, vector<8x32xf32>, vector<8x32xf32>, vector<8x32xf32>, vector<8x32xf32>, vector<8x32xf32>, vector<8x32xf32>, vector<8x32xf32>, vector<8x32xf32>, vector<8x32xf32>, vector<8x32xf32>, vector<8x32xf32>, vector<8x32xf32>, vector<8x32xf32>, vector<8x32xf32>, vector<8x32xf32> -> vector<8x512xf32>
    %80 = tpu.concatenate %17, %18, %19, %20, %25, %26, %27, %28, %33, %34, %35, %36, %41, %42, %43, %44 in 1 : vector<8x32xf32>, vector<8x32xf32>, vector<8x32xf32>, vector<8x32xf32>, vector<8x32xf32>, vector<8x32xf32>, vector<8x32xf32>, vector<8x32xf32>, vector<8x32xf32>, vector<8x32xf32>, vector<8x32xf32>, vector<8x32xf32>, vector<8x32xf32>, vector<8x32xf32>, vector<8x32xf32>, vector<8x32xf32> -> vector<8x512xf32>
    %81 = tpu.concatenate %19, %20, %21, %22, %27, %28, %29, %30, %35, %36, %37, %38, %43, %44, %45, %46 in 1 : vector<8x32xf32>, vector<8x32xf32>, vector<8x32xf32>, vector<8x32xf32>, vector<8x32xf32>, vector<8x32xf32>, vector<8x32xf32>, vector<8x32xf32>, vector<8x32xf32>, vector<8x32xf32>, vector<8x32xf32>, vector<8x32xf32>, vector<8x32xf32>, vector<8x32xf32>, vector<8x32xf32>, vector<8x32xf32> -> vector<8x512xf32>
    %82 = tpu.concatenate %31, %32, %33, %34, %39, %40, %41, %42, %47, %48, %49, %50, %55, %56, %57, %58 in 1 : vector<8x32xf32>, vector<8x32xf32>, vector<8x32xf32>, vector<8x32xf32>, vector<8x32xf32>, vector<8x32xf32>, vector<8x32xf32>, vector<8x32xf32>, vector<8x32xf32>, vector<8x32xf32>, vector<8x32xf32>, vector<8x32xf32>, vector<8x32xf32>, vector<8x32xf32>, vector<8x32xf32>, vector<8x32xf32> -> vector<8x512xf32>
    %83 = tpu.concatenate %33, %34, %35, %36, %41, %42, %43, %44, %49, %50, %51, %52, %57, %58, %59, %60 in 1 : vector<8x32xf32>, vector<8x32xf32>, vector<8x32xf32>, vector<8x32xf32>, vector<8x32xf32>, vector<8x32xf32>, vector<8x32xf32>, vector<8x32xf32>, vector<8x32xf32>, vector<8x32xf32>, vector<8x32xf32>, vector<8x32xf32>, vector<8x32xf32>, vector<8x32xf32>, vector<8x32xf32>, vector<8x32xf32> -> vector<8x512xf32>
    %84 = tpu.concatenate %35, %36, %37, %38, %43, %44, %45, %46, %51, %52, %53, %54, %59, %60, %61, %62 in 1 : vector<8x32xf32>, vector<8x32xf32>, vector<8x32xf32>, vector<8x32xf32>, vector<8x32xf32>, vector<8x32xf32>, vector<8x32xf32>, vector<8x32xf32>, vector<8x32xf32>, vector<8x32xf32>, vector<8x32xf32>, vector<8x32xf32>, vector<8x32xf32>, vector<8x32xf32>, vector<8x32xf32>, vector<8x32xf32> -> vector<8x512xf32>
    %85 = tpu.concatenate %47, %48, %49, %50, %55, %56, %57, %58, %63, %64, %65, %66, %71, %72, %73, %74 in 1 : vector<8x32xf32>, vector<8x32xf32>, vector<8x32xf32>, vector<8x32xf32>, vector<8x32xf32>, vector<8x32xf32>, vector<8x32xf32>, vector<8x32xf32>, vector<8x32xf32>, vector<8x32xf32>, vector<8x32xf32>, vector<8x32xf32>, vector<8x32xf32>, vector<8x32xf32>, vector<8x32xf32>, vector<8x32xf32> -> vector<8x512xf32>
    %86 = tpu.concatenate %49, %50, %51, %52, %57, %58, %59, %60, %65, %66, %67, %68, %73, %74, %75, %76 in 1 : vector<8x32xf32>, vector<8x32xf32>, vector<8x32xf32>, vector<8x32xf32>, vector<8x32xf32>, vector<8x32xf32>, vector<8x32xf32>, vector<8x32xf32>, vector<8x32xf32>, vector<8x32xf32>, vector<8x32xf32>, vector<8x32xf32>, vector<8x32xf32>, vector<8x32xf32>, vector<8x32xf32>, vector<8x32xf32> -> vector<8x512xf32>
    %87 = tpu.concatenate %51, %52, %53, %54, %59, %60, %61, %62, %67, %68, %69, %70, %75, %76, %77, %78 in 1 : vector<8x32xf32>, vector<8x32xf32>, vector<8x32xf32>, vector<8x32xf32>, vector<8x32xf32>, vector<8x32xf32>, vector<8x32xf32>, vector<8x32xf32>, vector<8x32xf32>, vector<8x32xf32>, vector<8x32xf32>, vector<8x32xf32>, vector<8x32xf32>, vector<8x32xf32>, vector<8x32xf32>, vector<8x32xf32> -> vector<8x512xf32>
    %88 = tpu.concatenate %79, %80, %81, %82, %83, %84, %85, %86, %87 in 0 : vector<8x512xf32>, vector<8x512xf32>, vector<8x512xf32>, vector<8x512xf32>, vector<8x512xf32>, vector<8x512xf32>, vector<8x512xf32>, vector<8x512xf32>, vector<8x512xf32> -> vector<72x512xf32>
    %cst_14 = arith.constant dense<0.000000e+00> : vector<72x64xf32>
    %89 = tpu.matmul %88, %1, %cst_14 {dimension_numbers = #tpu.dot_dimension_numbers<[1], [0], [0], [1], [0, 0, 1, 1], [], []>} : vector<72x512xf32>, vector<512x64xf32>, vector<72x64xf32> -> vector<72x64xf32>
    %90 = vector.broadcast %5 : vector<1x64xf32> to vector<72x64xf32>
    %91 = arith.addf %89, %90 : vector<72x64xf32>
    %cst_15 = arith.constant 0.000000e+00 : f32
    %92 = vector.broadcast %cst_15 : f32 to vector<72x64xf32>
    %93 = arith.maximumf %91, %92 : vector<72x64xf32>
    %94 = vector.extract_strided_slice %93 {offsets = [0, 0], sizes = [8, 64], strides = [1, 1]} : vector<72x64xf32> to vector<8x64xf32>
    %95 = vector.extract_strided_slice %93 {offsets = [8, 0], sizes = [8, 64], strides = [1, 1]} : vector<72x64xf32> to vector<8x64xf32>
    %96 = vector.extract_strided_slice %93 {offsets = [16, 0], sizes = [8, 64], strides = [1, 1]} : vector<72x64xf32> to vector<8x64xf32>
    %97 = vector.extract_strided_slice %93 {offsets = [24, 0], sizes = [8, 64], strides = [1, 1]} : vector<72x64xf32> to vector<8x64xf32>
    %98 = vector.extract_strided_slice %93 {offsets = [32, 0], sizes = [8, 64], strides = [1, 1]} : vector<72x64xf32> to vector<8x64xf32>
    %99 = vector.extract_strided_slice %93 {offsets = [40, 0], sizes = [8, 64], strides = [1, 1]} : vector<72x64xf32> to vector<8x64xf32>
    %100 = vector.extract_strided_slice %93 {offsets = [48, 0], sizes = [8, 64], strides = [1, 1]} : vector<72x64xf32> to vector<8x64xf32>
    %101 = vector.extract_strided_slice %93 {offsets = [56, 0], sizes = [8, 64], strides = [1, 1]} : vector<72x64xf32> to vector<8x64xf32>
    %102 = vector.extract_strided_slice %93 {offsets = [64, 0], sizes = [8, 64], strides = [1, 1]} : vector<72x64xf32> to vector<8x64xf32>
    %103 = tpu.concatenate %94, %95, %96, %97, %98, %99, %100, %101, %102 in 1 : vector<8x64xf32>, vector<8x64xf32>, vector<8x64xf32>, vector<8x64xf32>, vector<8x64xf32>, vector<8x64xf32>, vector<8x64xf32>, vector<8x64xf32>, vector<8x64xf32> -> vector<8x576xf32>
    %cst_16 = arith.constant dense<0.000000e+00> : vector<8x64xf32>
    %104 = tpu.matmul %103, %2, %cst_16 {dimension_numbers = #tpu.dot_dimension_numbers<[1], [0], [0], [1], [0, 0, 1, 1], [], []>} : vector<8x576xf32>, vector<576x64xf32>, vector<8x64xf32> -> vector<8x64xf32>
    %105 = vector.broadcast %6 : vector<1x64xf32> to vector<8x64xf32>
    %106 = arith.addf %104, %105 : vector<8x64xf32>
    %cst_17 = arith.constant 0.000000e+00 : f32
    %107 = vector.broadcast %cst_17 : f32 to vector<8x64xf32>
    %108 = arith.maximumf %106, %107 : vector<8x64xf32>
    %c0_18 = arith.constant 0 : index
    %c0_19 = arith.constant 0 : index
    %109 = vector.load %arg3[%c0_18, %c0_19] : memref<64x512xf32, #tpu.memory_space<vmem>>, vector<64x512xf32>
    %cst_20 = arith.constant dense<0.000000e+00> : vector<8x512xf32>
    %110 = tpu.matmul %108, %109, %cst_20 {dimension_numbers = #tpu.dot_dimension_numbers<[1], [0], [0], [1], [0, 0, 1, 1], [], []>} : vector<8x64xf32>, vector<64x512xf32>, vector<8x512xf32> -> vector<8x512xf32>
    %111 = vector.broadcast %7 : vector<1x512xf32> to vector<8x512xf32>
    %112 = arith.addf %110, %111 : vector<8x512xf32>
    %cst_21 = arith.constant 0.000000e+00 : f32
    %113 = vector.broadcast %cst_21 : f32 to vector<8x512xf32>
    %114 = arith.maximumf %112, %113 : vector<8x512xf32>
    %cst_22 = arith.constant dense<0.000000e+00> : vector<8x128xf32>
    %115 = tpu.matmul %114, %3, %cst_22 {dimension_numbers = #tpu.dot_dimension_numbers<[1], [0], [0], [1], [0, 0, 1, 1], [], []>} : vector<8x512xf32>, vector<512x128xf32>, vector<8x128xf32> -> vector<8x128xf32>
    %116 = vector.broadcast %8 : vector<1x128xf32> to vector<8x128xf32>
    %117 = arith.addf %115, %116 : vector<8x128xf32>
    %c0_23 = arith.constant 0 : index
    %c0_24 = arith.constant 0 : index
    %118 = vector.load %arg5[%c0_23, %c0_24] : memref<8x128xf32, #tpu.memory_space<vmem>>, vector<8x128xf32>
    tpu.vector_store %arg5[%c0_23, %c0_24], %117 {strides = array<i32>} : memref<8x128xf32, #tpu.memory_space<vmem>>, vector<8x128xf32>,
    return
  }
  func.func @transform_0(%arg0: i32) -> (i32, i32) {
    %c0_i32 = arith.constant 0 : i32
    %c0_i32_0 = arith.constant 0 : i32
    return %arg0, %c0_i32 : i32, i32
  }
  func.func @transform_1(%arg0: i32) -> (i32, i32) {
    %c0_i32 = arith.constant 0 : i32
    %c0_i32_0 = arith.constant 0 : i32
    %c0_i32_1 = arith.constant 0 : i32
    return %c0_i32, %c0_i32_0 : i32, i32
  }
  func.func @transform_2(%arg0: i32) -> (i32, i32) {
    %c0_i32 = arith.constant 0 : i32
    %c0_i32_0 = arith.constant 0 : i32
    %c0_i32_1 = arith.constant 0 : i32
    return %c0_i32, %c0_i32_0 : i32, i32
  }
  func.func @transform_3(%arg0: i32) -> (i32, i32) {
    %c0_i32 = arith.constant 0 : i32
    %c0_i32_0 = arith.constant 0 : i32
    %c0_i32_1 = arith.constant 0 : i32
    return %c0_i32, %c0_i32_0 : i32, i32
  }
  func.func @transform_4(%arg0: i32) -> (i32, i32) {
    %c0_i32 = arith.constant 0 : i32
    %c0_i32_0 = arith.constant 0 : i32
    return %arg0, %c0_i32 : i32, i32
  }
}

</mosaic_0001>

<llo_original>
// kernel: forward.1
$region0: #{forward.1}
  #allocation0 [shape = 'u32[]', space=smem, size = 0x4, offset = 0x4, fixed_abs, tag = 'smem constant byte address 0x4 - core index']
  #allocation1 [shape = 'u32[144,128]{1,0:T(1,128)}', space=vmem, size = 0x12000, scoped, tag = 'internal scratch']
  %s0 = inlined_call_operand.vmem [shape: f32[512,256], index: 0, kind: input, shape index: {}]
  %s1 = inlined_call_operand.vmem [shape: f32[1856,128], index: 1, kind: input, shape index: {}]
  %s2 = inlined_call_operand.vmem [shape: f32[64,512], index: 2, kind: input, shape index: {}]
  %s3 = inlined_call_operand.vmem [shape: f32[1,1024], index: 3, kind: input, shape index: {}]
  %s4 = inlined_call_operand.vmem [shape: f32[8,128], index: 4, kind: output, shape index: {}]
  %s5 = sld [smem:[#allocation0]]
  $region26: #{forward.1} parent=0
    _
  %s7 = ssub.s32 1, %s5
  %s8 = scalar_select 0, %s7, %s5
  // Predicated region
  $region2: #{forward.1} parent=0 // pred_check
    _
  $region3: #{forward.1} parent=0 // pred_check_branch
    %10 = sbr.rel (0) target = $region5
  $region4: #{forward.1} parent=0 // pred_region
    _
  $region5: #{forward.1} parent=0 // pred_fallthru
    _
  // Predicated region
  $region6: #{forward.1} parent=0 // pred_check
    _
  $region7: #{forward.1} parent=0 // pred_check_branch
    %12 = sbr.rel (0) target = $region9
  $region8: #{forward.1} parent=0 // pred_region
    _
  $region9: #{forward.1} parent=0 // pred_fallthru
    _
  // Predicated region
  $region10: #{forward.1} parent=0 // pred_check
    _
  $region11: #{forward.1} parent=0 // pred_check_branch
    %14 = sbr.rel (0) target = $region13
  $region12: #{forward.1} parent=0 // pred_region
    _
  $region13: #{forward.1} parent=0 // pred_fallthru
    _
  // Predicated region
  $region14: #{forward.1} parent=0 // pred_check
    _
  $region15: #{forward.1} parent=0 // pred_check_branch
    %16 = sbr.rel (0) target = $region17
  $region16: #{forward.1} parent=0 // pred_region
    _
  $region17: #{forward.1} parent=0 // pred_fallthru
    _
  %v17 = vld [vmem:[%s1] sm:$0xff]
  %v18 = vld [vmem:[%s1 + $0x8] sm:$0xff]
  %v19 = vld [vmem:[%s1 + $0x10] sm:$0xff]
  %v20 = vld [vmem:[%s1 + $0x18] sm:$0xff]
  %v21 = vld [vmem:[%s1 + $0x20] sm:$0xff]
  %v22 = vld [vmem:[%s1 + $0x28] sm:$0xff]
  %v23 = vld [vmem:[%s1 + $0x30] sm:$0xff]
  %v24 = vld [vmem:[%s1 + $0x38] sm:$0xff]
  %v25 = vld [vmem:[%s1 + $0x40] sm:$0xff]
  %v26 = vld [vmem:[%s1 + $0x48] sm:$0xff]
  %v27 = vld [vmem:[%s1 + $0x50] sm:$0xff]
  %v28 = vld [vmem:[%s1 + $0x58] sm:$0xff]
  %v29 = vld [vmem:[%s1 + $0x60] sm:$0xff]
  %v30 = vld [vmem:[%s1 + $0x68] sm:$0xff]
  %v31 = vld [vmem:[%s1 + $0x70] sm:$0xff]
  %v32 = vld [vmem:[%s1 + $0x78] sm:$0xff]
  %v33 = vld [vmem:[%s1 + $0x80] sm:$0xff]
  %v34 = vld [vmem:[%s1 + $0x88] sm:$0xff]
  %v35 = vld [vmem:[%s1 + $0x90] sm:$0xff]
  %v36 = vld [vmem:[%s1 + $0x98] sm:$0xff]
  %v37 = vld [vmem:[%s1 + $0xa0] sm:$0xff]
  %v38 = vld [vmem:[%s1 + $0xa8] sm:$0xff]
  %v39 = vld [vmem:[%s1 + $0xb0] sm:$0xff]
  %v40 = vld [vmem:[%s1 + $0xb8] sm:$0xff]
  %v41 = vld [vmem:[%s1 + $0xc0] sm:$0xff]
  %v42 = vld [vmem:[%s1 + $0xc8] sm:$0xff]
  %v43 = vld [vmem:[%s1 + $0xd0] sm:$0xff]
  %v44 = vld [vmem:[%s1 + $0xd8] sm:$0xff]
  %v45 = vld [vmem:[%s1 + $0xe0] sm:$0xff]
  %v46 = vld [vmem:[%s1 + $0xe8] sm:$0xff]
  %v47 = vld [vmem:[%s1 + $0xf0] sm:$0xff]
  %v48 = vld [vmem:[%s1 + $0xf8] sm:$0xff]
  %v49 = vld [vmem:[%s1 + $0x100] sm:$0xff]
  %v50 = vld [vmem:[%s1 + $0x108] sm:$0xff]
  %v51 = vld [vmem:[%s1 + $0x110] sm:$0xff]
  %v52 = vld [vmem:[%s1 + $0x118] sm:$0xff]
  %v53 = vld [vmem:[%s1 + $0x120] sm:$0xff]
  %v54 = vld [vmem:[%s1 + $0x128] sm:$0xff]
  %v55 = vld [vmem:[%s1 + $0x130] sm:$0xff]
  %v56 = vld [vmem:[%s1 + $0x138] sm:$0xff]
  %v57 = vld [vmem:[%s1 + $0x140] sm:$0xff]
  %v58 = vld [vmem:[%s1 + $0x148] sm:$0xff]
  %v59 = vld [vmem:[%s1 + $0x150] sm:$0xff]
  %v60 = vld [vmem:[%s1 + $0x158] sm:$0xff]
  %v61 = vld [vmem:[%s1 + $0x160] sm:$0xff]
  %v62 = vld [vmem:[%s1 + $0x168] sm:$0xff]
  %v63 = vld [vmem:[%s1 + $0x170] sm:$0xff]
  %v64 = vld [vmem:[%s1 + $0x178] sm:$0xff]
  %v65 = vld [vmem:[%s1 + $0x180] sm:$0xff]
  %v66 = vld [vmem:[%s1 + $0x188] sm:$0xff]
  %v67 = vld [vmem:[%s1 + $0x190] sm:$0xff]
  %v68 = vld [vmem:[%s1 + $0x198] sm:$0xff]
  %v69 = vld [vmem:[%s1 + $0x1a0] sm:$0xff]
  %v70 = vld [vmem:[%s1 + $0x1a8] sm:$0xff]
  %v71 = vld [vmem:[%s1 + $0x1b0] sm:$0xff]
  %v72 = vld [vmem:[%s1 + $0x1b8] sm:$0xff]
  %v73 = vld [vmem:[%s1 + $0x1c0] sm:$0xff]
  %v74 = vld [vmem:[%s1 + $0x1c8] sm:$0xff]
  %v75 = vld [vmem:[%s1 + $0x1d0] sm:$0xff]
  %v76 = vld [vmem:[%s1 + $0x1d8] sm:$0xff]
  %v77 = vld [vmem:[%s1 + $0x1e0] sm:$0xff]
  %v78 = vld [vmem:[%s1 + $0x1e8] sm:$0xff]
  %v79 = vld [vmem:[%s1 + $0x1f0] sm:$0xff]
  %v80 = vld [vmem:[%s1 + $0x1f8] sm:$0xff]
  %v81 = vld [vmem:[%s1 + $0x200] sm:$0xff]
  %v82 = vld [vmem:[%s1 + $0x208] sm:$0xff]
  %v83 = vld [vmem:[%s1 + $0x210] sm:$0xff]
  %v84 = vld [vmem:[%s1 + $0x218] sm:$0xff]
  %v85 = vld [vmem:[%s1 + $0x220] sm:$0xff]
  %v86 = vld [vmem:[%s1 + $0x228] sm:$0xff]
  %v87 = vld [vmem:[%s1 + $0x230] sm:$0xff]
  %v88 = vld [vmem:[%s1 + $0x238] sm:$0xff]
  %v89 = vld [vmem:[%s1 + $0x240] sm:$0xff]
  %v90 = vld [vmem:[%s1 + $0x248] sm:$0xff]
  %v91 = vld [vmem:[%s1 + $0x250] sm:$0xff]
  %v92 = vld [vmem:[%s1 + $0x258] sm:$0xff]
  %v93 = vld [vmem:[%s1 + $0x260] sm:$0xff]
  %v94 = vld [vmem:[%s1 + $0x268] sm:$0xff]
  %v95 = vld [vmem:[%s1 + $0x270] sm:$0xff]
  %v96 = vld [vmem:[%s1 + $0x278] sm:$0xff]
  %v97 = vld [vmem:[%s1 + $0x280] sm:$0xff]
  %v98 = vld [vmem:[%s1 + $0x288] sm:$0xff]
  %v99 = vld [vmem:[%s1 + $0x290] sm:$0xff]
  %v100 = vld [vmem:[%s1 + $0x298] sm:$0xff]
  %v101 = vld [vmem:[%s1 + $0x2a0] sm:$0xff]
  %v102 = vld [vmem:[%s1 + $0x2a8] sm:$0xff]
  %v103 = vld [vmem:[%s1 + $0x2b0] sm:$0xff]
  %v104 = vld [vmem:[%s1 + $0x2b8] sm:$0xff]
  %v105 = vld [vmem:[%s1 + $0x2c0] sm:$0xff]
  %v106 = vld [vmem:[%s1 + $0x2c8] sm:$0xff]
  %v107 = vld [vmem:[%s1 + $0x2d0] sm:$0xff]
  %v108 = vld [vmem:[%s1 + $0x2d8] sm:$0xff]
  %v109 = vld [vmem:[%s1 + $0x2e0] sm:$0xff]
  %v110 = vld [vmem:[%s1 + $0x2e8] sm:$0xff]
  %v111 = vld [vmem:[%s1 + $0x2f0] sm:$0xff]
  %v112 = vld [vmem:[%s1 + $0x2f8] sm:$0xff]
  %v113 = vld [vmem:[%s1 + $0x300] sm:$0xff]
  %v114 = vld [vmem:[%s1 + $0x308] sm:$0xff]
  %v115 = vld [vmem:[%s1 + $0x310] sm:$0xff]
  %v116 = vld [vmem:[%s1 + $0x318] sm:$0xff]
  %v117 = vld [vmem:[%s1 + $0x320] sm:$0xff]
  %v118 = vld [vmem:[%s1 + $0x328] sm:$0xff]
  %v119 = vld [vmem:[%s1 + $0x330] sm:$0xff]
  %v120 = vld [vmem:[%s1 + $0x338] sm:$0xff]
  %v121 = vld [vmem:[%s1 + $0x340] sm:$0xff]
  %v122 = vld [vmem:[%s1 + $0x348] sm:$0xff]
  %v123 = vld [vmem:[%s1 + $0x350] sm:$0xff]
  %v124 = vld [vmem:[%s1 + $0x358] sm:$0xff]
  %v125 = vld [vmem:[%s1 + $0x360] sm:$0xff]
  %v126 = vld [vmem:[%s1 + $0x368] sm:$0xff]
  %v127 = vld [vmem:[%s1 + $0x370] sm:$0xff]
  %v128 = vld [vmem:[%s1 + $0x378] sm:$0xff]
  %v129 = vld [vmem:[%s1 + $0x380] sm:$0xff]
  %v130 = vld [vmem:[%s1 + $0x388] sm:$0xff]
  %v131 = vld [vmem:[%s1 + $0x390] sm:$0xff]
  %v132 = vld [vmem:[%s1 + $0x398] sm:$0xff]
  %v133 = vld [vmem:[%s1 + $0x3a0] sm:$0xff]
  %v134 = vld [vmem:[%s1 + $0x3a8] sm:$0xff]
  %v135 = vld [vmem:[%s1 + $0x3b0] sm:$0xff]
  %v136 = vld [vmem:[%s1 + $0x3b8] sm:$0xff]
  %v137 = vld [vmem:[%s1 + $0x3c0] sm:$0xff]
  %v138 = vld [vmem:[%s1 + $0x3c8] sm:$0xff]
  %v139 = vld [vmem:[%s1 + $0x3d0] sm:$0xff]
  %v140 = vld [vmem:[%s1 + $0x3d8] sm:$0xff]
  %v141 = vld [vmem:[%s1 + $0x3e0] sm:$0xff]
  %v142 = vld [vmem:[%s1 + $0x3e8] sm:$0xff]
  %v143 = vld [vmem:[%s1 + $0x3f0] sm:$0xff]
  %v144 = vld [vmem:[%s1 + $0x3f8] sm:$0xff]
  %v145 = vld [vmem:[%s1 + $0x400] sm:$0xff]
  %v146 = vld [vmem:[%s1 + $0x408] sm:$0xff]
  %v147 = vld [vmem:[%s1 + $0x410] sm:$0xff]
  %v148 = vld [vmem:[%s1 + $0x418] sm:$0xff]
  %v149 = vld [vmem:[%s1 + $0x420] sm:$0xff]
  %v150 = vld [vmem:[%s1 + $0x428] sm:$0xff]
  %v151 = vld [vmem:[%s1 + $0x430] sm:$0xff]
  %v152 = vld [vmem:[%s1 + $0x438] sm:$0xff]
  %v153 = vld [vmem:[%s1 + $0x440] sm:$0xff]
  %v154 = vld [vmem:[%s1 + $0x448] sm:$0xff]
  %v155 = vld [vmem:[%s1 + $0x450] sm:$0xff]
  %v156 = vld [vmem:[%s1 + $0x458] sm:$0xff]
  %v157 = vld [vmem:[%s1 + $0x460] sm:$0xff]
  %v158 = vld [vmem:[%s1 + $0x468] sm:$0xff]
  %v159 = vld [vmem:[%s1 + $0x470] sm:$0xff]
  %v160 = vld [vmem:[%s1 + $0x478] sm:$0xff]
  %v161 = vld [vmem:[%s1 + $0x480] sm:$0xff]
  %v162 = vld [vmem:[%s1 + $0x488] sm:$0xff]
  %v163 = vld [vmem:[%s1 + $0x490] sm:$0xff]
  %v164 = vld [vmem:[%s1 + $0x498] sm:$0xff]
  %v165 = vld [vmem:[%s1 + $0x4a0] sm:$0xff]
  %v166 = vld [vmem:[%s1 + $0x4a8] sm:$0xff]
  %v167 = vld [vmem:[%s1 + $0x4b0] sm:$0xff]
  %v168 = vld [vmem:[%s1 + $0x4b8] sm:$0xff]
  %v169 = vld [vmem:[%s1 + $0x4c0] sm:$0xff]
  %v170 = vld [vmem:[%s1 + $0x4c8] sm:$0xff]
  %v171 = vld [vmem:[%s1 + $0x4d0] sm:$0xff]
  %v172 = vld [vmem:[%s1 + $0x4d8] sm:$0xff]
  %v173 = vld [vmem:[%s1 + $0x4e0] sm:$0xff]
  %v174 = vld [vmem:[%s1 + $0x4e8] sm:$0xff]
  %v175 = vld [vmem:[%s1 + $0x4f0] sm:$0xff]
  %v176 = vld [vmem:[%s1 + $0x4f8] sm:$0xff]
  %v177 = vld [vmem:[%s1 + $0x500] sm:$0xff]
  %v178 = vld [vmem:[%s1 + $0x508] sm:$0xff]
  %v179 = vld [vmem:[%s1 + $0x510] sm:$0xff]
  %v180 = vld [vmem:[%s1 + $0x518] sm:$0xff]
  %v181 = vld [vmem:[%s1 + $0x520] sm:$0xff]
  %v182 = vld [vmem:[%s1 + $0x528] sm:$0xff]
  %v183 = vld [vmem:[%s1 + $0x530] sm:$0xff]
  %v184 = vld [vmem:[%s1 + $0x538] sm:$0xff]
  %v185 = vld [vmem:[%s1 + $0x540] sm:$0xff]
  %v186 = vld [vmem:[%s1 + $0x548] sm:$0xff]
  %v187 = vld [vmem:[%s1 + $0x550] sm:$0xff]
  %v188 = vld [vmem:[%s1 + $0x558] sm:$0xff]
  %v189 = vld [vmem:[%s1 + $0x560] sm:$0xff]
  %v190 = vld [vmem:[%s1 + $0x568] sm:$0xff]
  %v191 = vld [vmem:[%s1 + $0x570] sm:$0xff]
  %v192 = vld [vmem:[%s1 + $0x578] sm:$0xff]
  %v193 = vld [vmem:[%s1 + $0x580] sm:$0xff]
  %v194 = vld [vmem:[%s1 + $0x588] sm:$0xff]
  %v195 = vld [vmem:[%s1 + $0x590] sm:$0xff]
  %v196 = vld [vmem:[%s1 + $0x598] sm:$0xff]
  %v197 = vld [vmem:[%s1 + $0x5a0] sm:$0xff]
  %v198 = vld [vmem:[%s1 + $0x5a8] sm:$0xff]
  %v199 = vld [vmem:[%s1 + $0x5b0] sm:$0xff]
  %v200 = vld [vmem:[%s1 + $0x5b8] sm:$0xff]
  %v201 = vld [vmem:[%s1 + $0x5c0] sm:$0xff]
  %v202 = vld [vmem:[%s1 + $0x5c8] sm:$0xff]
  %v203 = vld [vmem:[%s1 + $0x5d0] sm:$0xff]
  %v204 = vld [vmem:[%s1 + $0x5d8] sm:$0xff]
  %v205 = vld [vmem:[%s1 + $0x5e0] sm:$0xff]
  %v206 = vld [vmem:[%s1 + $0x5e8] sm:$0xff]
  %v207 = vld [vmem:[%s1 + $0x5f0] sm:$0xff]
  %v208 = vld [vmem:[%s1 + $0x5f8] sm:$0xff]
  %v209 = vld [vmem:[%s1 + $0x600] sm:$0xff]
  %v210 = vld [vmem:[%s1 + $0x608] sm:$0xff]
  %v211 = vld [vmem:[%s1 + $0x610] sm:$0xff]
  %v212 = vld [vmem:[%s1 + $0x618] sm:$0xff]
  %v213 = vld [vmem:[%s1 + $0x620] sm:$0xff]
  %v214 = vld [vmem:[%s1 + $0x628] sm:$0xff]
  %v215 = vld [vmem:[%s1 + $0x630] sm:$0xff]
  %v216 = vld [vmem:[%s1 + $0x638] sm:$0xff]
  %v217 = vld [vmem:[%s1 + $0x640] sm:$0xff]
  %v218 = vld [vmem:[%s1 + $0x648] sm:$0xff]
  %v219 = vld [vmem:[%s1 + $0x650] sm:$0xff]
  %v220 = vld [vmem:[%s1 + $0x658] sm:$0xff]
  %v221 = vld [vmem:[%s1 + $0x660] sm:$0xff]
  %v222 = vld [vmem:[%s1 + $0x668] sm:$0xff]
  %v223 = vld [vmem:[%s1 + $0x670] sm:$0xff]
  %v224 = vld [vmem:[%s1 + $0x678] sm:$0xff]
  %v225 = vld [vmem:[%s1 + $0x680] sm:$0xff]
  %v226 = vld [vmem:[%s1 + $0x688] sm:$0xff]
  %v227 = vld [vmem:[%s1 + $0x690] sm:$0xff]
  %v228 = vld [vmem:[%s1 + $0x698] sm:$0xff]
  %v229 = vld [vmem:[%s1 + $0x6a0] sm:$0xff]
  %v230 = vld [vmem:[%s1 + $0x6a8] sm:$0xff]
  %v231 = vld [vmem:[%s1 + $0x6b0] sm:$0xff]
  %v232 = vld [vmem:[%s1 + $0x6b8] sm:$0xff]
  %v233 = vld [vmem:[%s1 + $0x6c0] sm:$0xff]
  %v234 = vld [vmem:[%s1 + $0x6c8] sm:$0xff]
  %v235 = vld [vmem:[%s1 + $0x6d0] sm:$0xff]
  %v236 = vld [vmem:[%s1 + $0x6d8] sm:$0xff]
  %v237 = vld [vmem:[%s1 + $0x6e0] sm:$0xff]
  %v238 = vld [vmem:[%s1 + $0x6e8] sm:$0xff]
  %v239 = vld [vmem:[%s1 + $0x6f0] sm:$0xff]
  %v240 = vld [vmem:[%s1 + $0x6f8] sm:$0xff]
  %v241 = vld [vmem:[%s1 + $0x700] sm:$0xff]
  %v242 = vld [vmem:[%s1 + $0x708] sm:$0xff]
  %v243 = vld [vmem:[%s1 + $0x710] sm:$0xff]
  %v244 = vld [vmem:[%s1 + $0x718] sm:$0xff]
  %v245 = vld [vmem:[%s1 + $0x720] sm:$0xff]
  %v246 = vld [vmem:[%s1 + $0x728] sm:$0xff]
  %v247 = vld [vmem:[%s1 + $0x730] sm:$0xff]
  %v248 = vld [vmem:[%s1 + $0x738] sm:$0xff]
  %v249 = vld [vmem:[%s3] sm:$0x1]
  %v250 = vld [vmem:[%s3 + $0x1] sm:$0x1]
  %v251 = vld [vmem:[%s3 + $0x2] sm:$0x1]
  %v252 = vld [vmem:[%s3 + $0x3] sm:$0xf]
  %v253 = vld [vmem:[%s3 + $0x7] sm:$0x1]
  %v254 = vld [vmem:[%s0] sm:$0xff]
  %v255 = vld [vmem:[%s0 + $0x8] sm:$0xff]
  %v256 = vld [vmem:[%s0 + $0x10] sm:$0xff]
  %v257 = vld [vmem:[%s0 + $0x18] sm:$0xff]
  %v258 = vld [vmem:[%s0 + $0x20] sm:$0xff]
  %v259 = vld [vmem:[%s0 + $0x28] sm:$0xff]
  %v260 = vld [vmem:[%s0 + $0x30] sm:$0xff]
  %v261 = vld [vmem:[%s0 + $0x38] sm:$0xff]
  %v262 = vld [vmem:[%s0 + $0x40] sm:$0xff]
  %v263 = vld [vmem:[%s0 + $0x48] sm:$0xff]
  %v264 = vld [vmem:[%s0 + $0x50] sm:$0xff]
  %v265 = vld [vmem:[%s0 + $0x58] sm:$0xff]
  %v266 = vld [vmem:[%s0 + $0x60] sm:$0xff]
  %v267 = vld [vmem:[%s0 + $0x68] sm:$0xff]
  %v268 = vld [vmem:[%s0 + $0x70] sm:$0xff]
  %v269 = vld [vmem:[%s0 + $0x78] sm:$0xff]
  %v270 = vld [vmem:[%s0 + $0x80] sm:$0xff]
  %v271 = vld [vmem:[%s0 + $0x88] sm:$0xff]
  %v272 = vld [vmem:[%s0 + $0x90] sm:$0xff]
  %v273 = vld [vmem:[%s0 + $0x98] sm:$0xff]
  %v274 = vld [vmem:[%s0 + $0xa0] sm:$0xff]
  %v275 = vld [vmem:[%s0 + $0xa8] sm:$0xff]
  %v276 = vld [vmem:[%s0 + $0xb0] sm:$0xff]
  %v277 = vld [vmem:[%s0 + $0xb8] sm:$0xff]
  %v278 = vld [vmem:[%s0 + $0xc0] sm:$0xff]
  %v279 = vld [vmem:[%s0 + $0xc8] sm:$0xff]
  %v280 = vld [vmem:[%s0 + $0xd0] sm:$0xff]
  %v281 = vld [vmem:[%s0 + $0xd8] sm:$0xff]
  %v282 = vld [vmem:[%s0 + $0xe0] sm:$0xff]
  %v283 = vld [vmem:[%s0 + $0xe8] sm:$0xff]
  %v284 = vld [vmem:[%s0 + $0xf0] sm:$0xff]
  %v285 = vld [vmem:[%s0 + $0xf8] sm:$0xff]
  %v286 = vld [vmem:[%s0 + $0x100] sm:$0xff]
  %v287 = vld [vmem:[%s0 + $0x108] sm:$0xff]
  %v288 = vld [vmem:[%s0 + $0x110] sm:$0xff]
  %v289 = vld [vmem:[%s0 + $0x118] sm:$0xff]
  %v290 = vld [vmem:[%s0 + $0x120] sm:$0xff]
  %v291 = vld [vmem:[%s0 + $0x128] sm:$0xff]
  %v292 = vld [vmem:[%s0 + $0x130] sm:$0xff]
  %v293 = vld [vmem:[%s0 + $0x138] sm:$0xff]
  %v294 = vld [vmem:[%s0 + $0x140] sm:$0xff]
  %v295 = vld [vmem:[%s0 + $0x148] sm:$0xff]
  %v296 = vld [vmem:[%s0 + $0x150] sm:$0xff]
  %v297 = vld [vmem:[%s0 + $0x158] sm:$0xff]
  %v298 = vld [vmem:[%s0 + $0x160] sm:$0xff]
  %v299 = vld [vmem:[%s0 + $0x168] sm:$0xff]
  %v300 = vld [vmem:[%s0 + $0x170] sm:$0xff]
  %v301 = vld [vmem:[%s0 + $0x178] sm:$0xff]
  %v302 = vld [vmem:[%s0 + $0x180] sm:$0xff]
  %v303 = vld [vmem:[%s0 + $0x188] sm:$0xff]
  %v304 = vld [vmem:[%s0 + $0x190] sm:$0xff]
  %v305 = vld [vmem:[%s0 + $0x198] sm:$0xff]
  %v306 = vld [vmem:[%s0 + $0x1a0] sm:$0xff]
  %v307 = vld [vmem:[%s0 + $0x1a8] sm:$0xff]
  %v308 = vld [vmem:[%s0 + $0x1b0] sm:$0xff]
  %v309 = vld [vmem:[%s0 + $0x1b8] sm:$0xff]
  %v310 = vld [vmem:[%s0 + $0x1c0] sm:$0xff]
  %v311 = vld [vmem:[%s0 + $0x1c8] sm:$0xff]
  %v312 = vld [vmem:[%s0 + $0x1d0] sm:$0xff]
  %v313 = vld [vmem:[%s0 + $0x1d8] sm:$0xff]
  %v314 = vld [vmem:[%s0 + $0x1e0] sm:$0xff]
  %v315 = vld [vmem:[%s0 + $0x1e8] sm:$0xff]
  %v316 = vld [vmem:[%s0 + $0x1f0] sm:$0xff]
  %v317 = vld [vmem:[%s0 + $0x1f8] sm:$0xff]
  %v318 = vld [vmem:[%s0 + $0x200] sm:$0xff]
  %v319 = vld [vmem:[%s0 + $0x208] sm:$0xff]
  %v320 = vld [vmem:[%s0 + $0x210] sm:$0xff]
  %v321 = vld [vmem:[%s0 + $0x218] sm:$0xff]
  %v322 = vld [vmem:[%s0 + $0x220] sm:$0xff]
  %v323 = vld [vmem:[%s0 + $0x228] sm:$0xff]
  %v324 = vld [vmem:[%s0 + $0x230] sm:$0xff]
  %v325 = vld [vmem:[%s0 + $0x238] sm:$0xff]
  %v326 = vld [vmem:[%s0 + $0x240] sm:$0xff]
  %v327 = vld [vmem:[%s0 + $0x248] sm:$0xff]
  %v328 = vld [vmem:[%s0 + $0x250] sm:$0xff]
  %v329 = vld [vmem:[%s0 + $0x258] sm:$0xff]
  %v330 = vld [vmem:[%s0 + $0x260] sm:$0xff]
  %v331 = vld [vmem:[%s0 + $0x268] sm:$0xff]
  %v332 = vld [vmem:[%s0 + $0x270] sm:$0xff]
  %v333 = vld [vmem:[%s0 + $0x278] sm:$0xff]
  %v334 = vld [vmem:[%s0 + $0x280] sm:$0xff]
  %v335 = vld [vmem:[%s0 + $0x288] sm:$0xff]
  %v336 = vld [vmem:[%s0 + $0x290] sm:$0xff]
  %v337 = vld [vmem:[%s0 + $0x298] sm:$0xff]
  %v338 = vld [vmem:[%s0 + $0x2a0] sm:$0xff]
  %v339 = vld [vmem:[%s0 + $0x2a8] sm:$0xff]
  %v340 = vld [vmem:[%s0 + $0x2b0] sm:$0xff]
  %v341 = vld [vmem:[%s0 + $0x2b8] sm:$0xff]
  %v342 = vld [vmem:[%s0 + $0x2c0] sm:$0xff]
  %v343 = vld [vmem:[%s0 + $0x2c8] sm:$0xff]
  %v344 = vld [vmem:[%s0 + $0x2d0] sm:$0xff]
  %v345 = vld [vmem:[%s0 + $0x2d8] sm:$0xff]
  %v346 = vld [vmem:[%s0 + $0x2e0] sm:$0xff]
  %v347 = vld [vmem:[%s0 + $0x2e8] sm:$0xff]
  %v348 = vld [vmem:[%s0 + $0x2f0] sm:$0xff]
  %v349 = vld [vmem:[%s0 + $0x2f8] sm:$0xff]
  %v350 = vld [vmem:[%s0 + $0x300] sm:$0xff]
  %v351 = vld [vmem:[%s0 + $0x308] sm:$0xff]
  %v352 = vld [vmem:[%s0 + $0x310] sm:$0xff]
  %v353 = vld [vmem:[%s0 + $0x318] sm:$0xff]
  %v354 = vld [vmem:[%s0 + $0x320] sm:$0xff]
  %v355 = vld [vmem:[%s0 + $0x328] sm:$0xff]
  %v356 = vld [vmem:[%s0 + $0x330] sm:$0xff]
  %v357 = vld [vmem:[%s0 + $0x338] sm:$0xff]
  %v358 = vld [vmem:[%s0 + $0x340] sm:$0xff]
  %v359 = vld [vmem:[%s0 + $0x348] sm:$0xff]
  %v360 = vld [vmem:[%s0 + $0x350] sm:$0xff]
  %v361 = vld [vmem:[%s0 + $0x358] sm:$0xff]
  %v362 = vld [vmem:[%s0 + $0x360] sm:$0xff]
  %v363 = vld [vmem:[%s0 + $0x368] sm:$0xff]
  %v364 = vld [vmem:[%s0 + $0x370] sm:$0xff]
  %v365 = vld [vmem:[%s0 + $0x378] sm:$0xff]
  %v366 = vld [vmem:[%s0 + $0x380] sm:$0xff]
  %v367 = vld [vmem:[%s0 + $0x388] sm:$0xff]
  %v368 = vld [vmem:[%s0 + $0x390] sm:$0xff]
  %v369 = vld [vmem:[%s0 + $0x398] sm:$0xff]
  %v370 = vld [vmem:[%s0 + $0x3a0] sm:$0xff]
  %v371 = vld [vmem:[%s0 + $0x3a8] sm:$0xff]
  %v372 = vld [vmem:[%s0 + $0x3b0] sm:$0xff]
  %v373 = vld [vmem:[%s0 + $0x3b8] sm:$0xff]
  %v374 = vld [vmem:[%s0 + $0x3c0] sm:$0xff]
  %v375 = vld [vmem:[%s0 + $0x3c8] sm:$0xff]
  %v376 = vld [vmem:[%s0 + $0x3d0] sm:$0xff]
  %v377 = vld [vmem:[%s0 + $0x3d8] sm:$0xff]
  %v378 = vld [vmem:[%s0 + $0x3e0] sm:$0xff]
  %v379 = vld [vmem:[%s0 + $0x3e8] sm:$0xff]
  %v380 = vld [vmem:[%s0 + $0x3f0] sm:$0xff]
  %v381 = vld [vmem:[%s0 + $0x3f8] sm:$0xff]
  %v383 = vlaneseq
  %v384 = vshrl.u32 %v383, 7
  %v385 = vsub.s32 0, %v384
  %v386 = vrot.slane %v249, %v385
  %388 = vmatprep.subr.mxu0 0.0
  %389 = vmatpush1.msra.mxu0 %v17
  %390 = vmatprep.subr.mxu0 0.0
  %391 = vmatpush1.msra.mxu0 %v18
  %392 = vmatprep.subr.mxu0 0.0
  %393 = vmatpush1.msra.mxu0 %v19
  %394 = vmatprep.subr.mxu0 0.0
  %395 = vmatpush1.msra.mxu0 %v20
  %396 = vmatprep.subr.mxu0 0.0
  %397 = vmatpush1.msra.mxu0 %v21
  %398 = vmatprep.subr.mxu0 0.0
  %399 = vmatpush1.msra.mxu0 %v22
  %400 = vmatprep.subr.mxu0 0.0
  %401 = vmatpush1.msra.mxu0 %v23
  %402 = vmatprep.subr.mxu0 0.0
  %403 = vmatpush1.msra.mxu0 %v24
  %404 = vmatprep.subr.mxu0 0.0
  %405 = vmatpush1.msra.mxu0 %v25
  %406 = vmatprep.subr.mxu0 0.0
  %407 = vmatpush1.msra.mxu0 %v26
  %408 = vmatprep.subr.mxu0 0.0
  %409 = vmatpush1.msra.mxu0 %v27
  %410 = vmatprep.subr.mxu0 0.0
  %411 = vmatpush1.msra.mxu0 %v28
  %412 = vmatprep.subr.mxu0 0.0
  %413 = vmatpush1.msra.mxu0 %v29
  %414 = vmatprep.subr.mxu0 0.0
  %415 = vmatpush1.msra.mxu0 %v30
  %416 = vmatprep.subr.mxu0 0.0
  %417 = vmatpush1.msra.mxu0 %v31
  %418 = vmatprep.subr.mxu0 0.0
  %419 = vmatpush1.msra.mxu0 %v32
  %420 = vmatprep.subr.mxu0 0.0
  %421 = vmatpush1.msra.mxu0 %v33
  %422 = vmatprep.subr.mxu0 0.0
  %423 = vmatpush1.msra.mxu0 %v34
  %424 = vmatprep.subr.mxu0 0.0
  %425 = vmatpush1.msra.mxu0 %v35
  %426 = vmatprep.subr.mxu0 0.0
  %427 = vmatpush1.msra.mxu0 %v36
  %428 = vmatprep.subr.mxu0 0.0
  %429 = vmatpush1.msra.mxu0 %v37
  %430 = vmatprep.subr.mxu0 0.0
  %431 = vmatpush1.msra.mxu0 %v38
  %432 = vmatprep.subr.mxu0 0.0
  %433 = vmatpush1.msra.mxu0 %v39
  %434 = vmatprep.subr.mxu0 0.0
  %435 = vmatpush1.msra.mxu0 %v40
  %436 = vmatprep.subr.mxu0 0.0
  %437 = vmatpush1.msra.mxu0 %v41
  %438 = vmatprep.subr.mxu0 0.0
  %439 = vmatpush1.msra.mxu0 %v42
  %440 = vmatprep.subr.mxu0 0.0
  %441 = vmatpush1.msra.mxu0 %v43
  %442 = vmatprep.subr.mxu0 0.0
  %443 = vmatpush1.msra.mxu0 %v44
  %444 = vmatprep.subr.mxu0 0.0
  %445 = vmatpush1.msra.mxu0 %v45
  %446 = vmatprep.subr.mxu0 0.0
  %447 = vmatpush1.msra.mxu0 %v46
  %448 = vmatprep.subr.mxu0 0.0
  %449 = vmatpush1.msra.mxu0 %v47
  %450 = vmatprep.subr.mxu0 0.0
  %451 = vmatpush1.msra.mxu0 %v48
  %452 = vmatprep.mubr.f32.mxu0 %v255
  %453 = vmatmul.mubr.f32.gmra.mrb[0].mxu0 %v254
  %v454 = vpop.f32.mrb[0].mxu0
  %v455 = vadd.f32 %v386, %v454
  %v456 = vpop.f32.mrb[0].mxu0
  %457 = vmatprep.mubr.f32.mxu0 %v257
  %458 = vmatmul.mubr.f32.gmra.mrb[0].mxu0 %v256
  %v459 = vpop.f32.mrb[0].mxu0
  %v460 = vadd.f32 %v386, %v459
  %v461 = vpop.f32.mrb[0].mxu0
  %462 = vmatprep.mubr.f32.mxu0 %v259
  %463 = vmatmul.mubr.f32.gmra.mrb[0].mxu0 %v258
  %v464 = vpop.f32.mrb[0].mxu0
  %v465 = vadd.f32 %v386, %v464
  %v466 = vpop.f32.mrb[0].mxu0
  %467 = vmatprep.mubr.f32.mxu0 %v261
  %468 = vmatmul.mubr.f32.gmra.mrb[0].mxu0 %v260
  %v469 = vpop.f32.mrb[0].mxu0
  %v470 = vadd.f32 %v386, %v469
  %v471 = vpop.f32.mrb[0].mxu0
  %472 = vmatprep.mubr.f32.mxu0 %v263
  %473 = vmatmul.mubr.f32.gmra.mrb[0].mxu0 %v262
  %v474 = vpop.f32.mrb[0].mxu0
  %v475 = vadd.f32 %v386, %v474
  %v476 = vpop.f32.mrb[0].mxu0
  %477 = vmatprep.mubr.f32.mxu0 %v265
  %478 = vmatmul.mubr.f32.gmra.mrb[0].mxu0 %v264
  %v479 = vpop.f32.mrb[0].mxu0
  %v480 = vadd.f32 %v386, %v479
  %v481 = vpop.f32.mrb[0].mxu0
  %482 = vmatprep.mubr.f32.mxu0 %v267
  %483 = vmatmul.mubr.f32.gmra.mrb[0].mxu0 %v266
  %v484 = vpop.f32.mrb[0].mxu0
  %v485 = vadd.f32 %v386, %v484
  %v486 = vpop.f32.mrb[0].mxu0
  %487 = vmatprep.mubr.f32.mxu0 %v269
  %488 = vmatmul.mubr.f32.gmra.mrb[0].mxu0 %v268
  %v489 = vpop.f32.mrb[0].mxu0
  %v490 = vadd.f32 %v386, %v489
  %v491 = vpop.f32.mrb[0].mxu0
  %492 = vmatprep.mubr.f32.mxu0 %v271
  %493 = vmatmul.mubr.f32.gmra.mrb[0].mxu0 %v270
  %v494 = vpop.f32.mrb[0].mxu0
  %v495 = vadd.f32 %v386, %v494
  %v496 = vpop.f32.mrb[0].mxu0
  %497 = vmatprep.mubr.f32.mxu0 %v273
  %498 = vmatmul.mubr.f32.gmra.mrb[0].mxu0 %v272
  %v499 = vpop.f32.mrb[0].mxu0
  %v500 = vadd.f32 %v386, %v499
  %v501 = vpop.f32.mrb[0].mxu0
  %502 = vmatprep.mubr.f32.mxu0 %v275
  %503 = vmatmul.mubr.f32.gmra.mrb[0].mxu0 %v274
  %v504 = vpop.f32.mrb[0].mxu0
  %v505 = vadd.f32 %v386, %v504
  %v506 = vpop.f32.mrb[0].mxu0
  %507 = vmatprep.mubr.f32.mxu0 %v277
  %508 = vmatmul.mubr.f32.gmra.mrb[0].mxu0 %v276
  %v509 = vpop.f32.mrb[0].mxu0
  %v510 = vadd.f32 %v386, %v509
  %v511 = vpop.f32.mrb[0].mxu0
  %512 = vmatprep.mubr.f32.mxu0 %v279
  %513 = vmatmul.mubr.f32.gmra.mrb[0].mxu0 %v278
  %v514 = vpop.f32.mrb[0].mxu0
  %v515 = vadd.f32 %v386, %v514
  %v516 = vpop.f32.mrb[0].mxu0
  %517 = vmatprep.mubr.f32.mxu0 %v281
  %518 = vmatmul.mubr.f32.gmra.mrb[0].mxu0 %v280
  %v519 = vpop.f32.mrb[0].mxu0
  %v520 = vadd.f32 %v386, %v519
  %v521 = vpop.f32.mrb[0].mxu0
  %522 = vmatprep.mubr.f32.mxu0 %v283
  %523 = vmatmul.mubr.f32.gmra.mrb[0].mxu0 %v282
  %v524 = vpop.f32.mrb[0].mxu0
  %v525 = vadd.f32 %v386, %v524
  %v526 = vpop.f32.mrb[0].mxu0
  %527 = vmatprep.mubr.f32.mxu0 %v285
  %528 = vmatmul.mubr.f32.gmra.mrb[0].mxu0 %v284
  %v529 = vpop.f32.mrb[0].mxu0
  %v530 = vadd.f32 %v386, %v529
  %v531 = vpop.f32.mrb[0].mxu0
  %532 = vmatprep.mubr.f32.mxu0 %v287
  %533 = vmatmul.mubr.f32.gmra.mrb[0].mxu0 %v286
  %v534 = vpop.f32.mrb[0].mxu0
  %v535 = vadd.f32 %v386, %v534
  %v536 = vpop.f32.mrb[0].mxu0
  %537 = vmatprep.mubr.f32.mxu0 %v289
  %538 = vmatmul.mubr.f32.gmra.mrb[0].mxu0 %v288
  %v539 = vpop.f32.mrb[0].mxu0
  %v540 = vadd.f32 %v386, %v539
  %v541 = vpop.f32.mrb[0].mxu0
  %542 = vmatprep.mubr.f32.mxu0 %v291
  %543 = vmatmul.mubr.f32.gmra.mrb[0].mxu0 %v290
  %v544 = vpop.f32.mrb[0].mxu0
  %v545 = vadd.f32 %v386, %v544
  %v546 = vpop.f32.mrb[0].mxu0
  %547 = vmatprep.mubr.f32.mxu0 %v293
  %548 = vmatmul.mubr.f32.gmra.mrb[0].mxu0 %v292
  %v549 = vpop.f32.mrb[0].mxu0
  %v550 = vadd.f32 %v386, %v549
  %v551 = vpop.f32.mrb[0].mxu0
  %552 = vmatprep.mubr.f32.mxu0 %v295
  %553 = vmatmul.mubr.f32.gmra.mrb[0].mxu0 %v294
  %v554 = vpop.f32.mrb[0].mxu0
  %v555 = vadd.f32 %v386, %v554
  %v556 = vpop.f32.mrb[0].mxu0
  %557 = vmatprep.mubr.f32.mxu0 %v297
  %558 = vmatmul.mubr.f32.gmra.mrb[0].mxu0 %v296
  %v559 = vpop.f32.mrb[0].mxu0
  %v560 = vadd.f32 %v386, %v559
  %v561 = vpop.f32.mrb[0].mxu0
  %562 = vmatprep.mubr.f32.mxu0 %v299
  %563 = vmatmul.mubr.f32.gmra.mrb[0].mxu0 %v298
  %v564 = vpop.f32.mrb[0].mxu0
  %v565 = vadd.f32 %v386, %v564
  %v566 = vpop.f32.mrb[0].mxu0
  %567 = vmatprep.mubr.f32.mxu0 %v301
  %568 = vmatmul.mubr.f32.gmra.mrb[0].mxu0 %v300
  %v569 = vpop.f32.mrb[0].mxu0
  %v570 = vadd.f32 %v386, %v569
  %v571 = vpop.f32.mrb[0].mxu0
  %572 = vmatprep.mubr.f32.mxu0 %v303
  %573 = vmatmul.mubr.f32.gmra.mrb[0].mxu0 %v302
  %v574 = vpop.f32.mrb[0].mxu0
  %v575 = vadd.f32 %v386, %v574
  %v576 = vpop.f32.mrb[0].mxu0
  %577 = vmatprep.mubr.f32.mxu0 %v305
  %578 = vmatmul.mubr.f32.gmra.mrb[0].mxu0 %v304
  %v579 = vpop.f32.mrb[0].mxu0
  %v580 = vadd.f32 %v386, %v579
  %v581 = vpop.f32.mrb[0].mxu0
  %582 = vmatprep.mubr.f32.mxu0 %v307
  %583 = vmatmul.mubr.f32.gmra.mrb[0].mxu0 %v306
  %v584 = vpop.f32.mrb[0].mxu0
  %v585 = vadd.f32 %v386, %v584
  %v586 = vpop.f32.mrb[0].mxu0
  %587 = vmatprep.mubr.f32.mxu0 %v309
  %588 = vmatmul.mubr.f32.gmra.mrb[0].mxu0 %v308
  %v589 = vpop.f32.mrb[0].mxu0
  %v590 = vadd.f32 %v386, %v589
  %v591 = vpop.f32.mrb[0].mxu0
  %592 = vmatprep.mubr.f32.mxu0 %v311
  %593 = vmatmul.mubr.f32.gmra.mrb[0].mxu0 %v310
  %v594 = vpop.f32.mrb[0].mxu0
  %v595 = vadd.f32 %v386, %v594
  %v596 = vpop.f32.mrb[0].mxu0
  %597 = vmatprep.mubr.f32.mxu0 %v313
  %598 = vmatmul.mubr.f32.gmra.mrb[0].mxu0 %v312
  %v599 = vpop.f32.mrb[0].mxu0
  %v600 = vadd.f32 %v386, %v599
  %v601 = vpop.f32.mrb[0].mxu0
  %602 = vmatprep.mubr.f32.mxu0 %v315
  %603 = vmatmul.mubr.f32.gmra.mrb[0].mxu0 %v314
  %v604 = vpop.f32.mrb[0].mxu0
  %v605 = vadd.f32 %v386, %v604
  %v606 = vpop.f32.mrb[0].mxu0
  %607 = vmatprep.mubr.f32.mxu0 %v317
  %608 = vmatmul.mubr.f32.gmra.mrb[0].mxu0 %v316
  %v609 = vpop.f32.mrb[0].mxu0
  %v610 = vadd.f32 %v386, %v609
  %v611 = vpop.f32.mrb[0].mxu0
  %612 = vmatprep.mubr.f32.mxu0 %v319
  %613 = vmatmul.mubr.f32.gmra.mrb[0].mxu0 %v318
  %v614 = vpop.f32.mrb[0].mxu0
  %v615 = vadd.f32 %v386, %v614
  %v616 = vpop.f32.mrb[0].mxu0
  %617 = vmatprep.mubr.f32.mxu0 %v321
  %618 = vmatmul.mubr.f32.gmra.mrb[0].mxu0 %v320
  %v619 = vpop.f32.mrb[0].mxu0
  %v620 = vadd.f32 %v386, %v619
  %v621 = vpop.f32.mrb[0].mxu0
  %622 = vmatprep.mubr.f32.mxu0 %v323
  %623 = vmatmul.mubr.f32.gmra.mrb[0].mxu0 %v322
  %v624 = vpop.f32.mrb[0].mxu0
  %v625 = vadd.f32 %v386, %v624
  %v626 = vpop.f32.mrb[0].mxu0
  %627 = vmatprep.mubr.f32.mxu0 %v325
  %628 = vmatmul.mubr.f32.gmra.mrb[0].mxu0 %v324
  %v629 = vpop.f32.mrb[0].mxu0
  %v630 = vadd.f32 %v386, %v629
  %v631 = vpop.f32.mrb[0].mxu0
  %632 = vmatprep.mubr.f32.mxu0 %v327
  %633 = vmatmul.mubr.f32.gmra.mrb[0].mxu0 %v326
  %v634 = vpop.f32.mrb[0].mxu0
  %v635 = vadd.f32 %v386, %v634
  %v636 = vpop.f32.mrb[0].mxu0
  %637 = vmatprep.mubr.f32.mxu0 %v329
  %638 = vmatmul.mubr.f32.gmra.mrb[0].mxu0 %v328
  %v639 = vpop.f32.mrb[0].mxu0
  %v640 = vadd.f32 %v386, %v639
  %v641 = vpop.f32.mrb[0].mxu0
  %642 = vmatprep.mubr.f32.mxu0 %v331
  %643 = vmatmul.mubr.f32.gmra.mrb[0].mxu0 %v330
  %v644 = vpop.f32.mrb[0].mxu0
  %v645 = vadd.f32 %v386, %v644
  %v646 = vpop.f32.mrb[0].mxu0
  %647 = vmatprep.mubr.f32.mxu0 %v333
  %648 = vmatmul.mubr.f32.gmra.mrb[0].mxu0 %v332
  %v649 = vpop.f32.mrb[0].mxu0
  %v650 = vadd.f32 %v386, %v649
  %v651 = vpop.f32.mrb[0].mxu0
  %652 = vmatprep.mubr.f32.mxu0 %v335
  %653 = vmatmul.mubr.f32.gmra.mrb[0].mxu0 %v334
  %v654 = vpop.f32.mrb[0].mxu0
  %v655 = vadd.f32 %v386, %v654
  %v656 = vpop.f32.mrb[0].mxu0
  %657 = vmatprep.mubr.f32.mxu0 %v337
  %658 = vmatmul.mubr.f32.gmra.mrb[0].mxu0 %v336
  %v659 = vpop.f32.mrb[0].mxu0
  %v660 = vadd.f32 %v386, %v659
  %v661 = vpop.f32.mrb[0].mxu0
  %662 = vmatprep.mubr.f32.mxu0 %v339
  %663 = vmatmul.mubr.f32.gmra.mrb[0].mxu0 %v338
  %v664 = vpop.f32.mrb[0].mxu0
  %v665 = vadd.f32 %v386, %v664
  %v666 = vpop.f32.mrb[0].mxu0
  %667 = vmatprep.mubr.f32.mxu0 %v341
  %668 = vmatmul.mubr.f32.gmra.mrb[0].mxu0 %v340
  %v669 = vpop.f32.mrb[0].mxu0
  %v670 = vadd.f32 %v386, %v669
  %v671 = vpop.f32.mrb[0].mxu0
  %672 = vmatprep.mubr.f32.mxu0 %v343
  %673 = vmatmul.mubr.f32.gmra.mrb[0].mxu0 %v342
  %v674 = vpop.f32.mrb[0].mxu0
  %v675 = vadd.f32 %v386, %v674
  %v676 = vpop.f32.mrb[0].mxu0
  %677 = vmatprep.mubr.f32.mxu0 %v345
  %678 = vmatmul.mubr.f32.gmra.mrb[0].mxu0 %v344
  %v679 = vpop.f32.mrb[0].mxu0
  %v680 = vadd.f32 %v386, %v679
  %v681 = vpop.f32.mrb[0].mxu0
  %682 = vmatprep.mubr.f32.mxu0 %v347
  %683 = vmatmul.mubr.f32.gmra.mrb[0].mxu0 %v346
  %v684 = vpop.f32.mrb[0].mxu0
  %v685 = vadd.f32 %v386, %v684
  %v686 = vpop.f32.mrb[0].mxu0
  %687 = vmatprep.mubr.f32.mxu0 %v349
  %688 = vmatmul.mubr.f32.gmra.mrb[0].mxu0 %v348
  %v689 = vpop.f32.mrb[0].mxu0
  %v690 = vadd.f32 %v386, %v689
  %v691 = vpop.f32.mrb[0].mxu0
  %692 = vmatprep.mubr.f32.mxu0 %v351
  %693 = vmatmul.mubr.f32.gmra.mrb[0].mxu0 %v350
  %v694 = vpop.f32.mrb[0].mxu0
  %v695 = vadd.f32 %v386, %v694
  %v696 = vpop.f32.mrb[0].mxu0
  %697 = vmatprep.mubr.f32.mxu0 %v353
  %698 = vmatmul.mubr.f32.gmra.mrb[0].mxu0 %v352
  %v699 = vpop.f32.mrb[0].mxu0
  %v700 = vadd.f32 %v386, %v699
  %v701 = vpop.f32.mrb[0].mxu0
  %702 = vmatprep.mubr.f32.mxu0 %v355
  %703 = vmatmul.mubr.f32.gmra.mrb[0].mxu0 %v354
  %v704 = vpop.f32.mrb[0].mxu0
  %v705 = vadd.f32 %v386, %v704
  %v706 = vpop.f32.mrb[0].mxu0
  %707 = vmatprep.mubr.f32.mxu0 %v357
  %708 = vmatmul.mubr.f32.gmra.mrb[0].mxu0 %v356
  %v709 = vpop.f32.mrb[0].mxu0
  %v710 = vadd.f32 %v386, %v709
  %v711 = vpop.f32.mrb[0].mxu0
  %712 = vmatprep.mubr.f32.mxu0 %v359
  %713 = vmatmul.mubr.f32.gmra.mrb[0].mxu0 %v358
  %v714 = vpop.f32.mrb[0].mxu0
  %v715 = vadd.f32 %v386, %v714
  %v716 = vpop.f32.mrb[0].mxu0
  %717 = vmatprep.mubr.f32.mxu0 %v361
  %718 = vmatmul.mubr.f32.gmra.mrb[0].mxu0 %v360
  %v719 = vpop.f32.mrb[0].mxu0
  %v720 = vadd.f32 %v386, %v719
  %v721 = vpop.f32.mrb[0].mxu0
  %722 = vmatprep.mubr.f32.mxu0 %v363
  %723 = vmatmul.mubr.f32.gmra.mrb[0].mxu0 %v362
  %v724 = vpop.f32.mrb[0].mxu0
  %v725 = vadd.f32 %v386, %v724
  %v726 = vpop.f32.mrb[0].mxu0
  %727 = vmatprep.mubr.f32.mxu0 %v365
  %728 = vmatmul.mubr.f32.gmra.mrb[0].mxu0 %v364
  %v729 = vpop.f32.mrb[0].mxu0
  %v730 = vadd.f32 %v386, %v729
  %v731 = vpop.f32.mrb[0].mxu0
  %732 = vmatprep.mubr.f32.mxu0 %v367
  %733 = vmatmul.mubr.f32.gmra.mrb[0].mxu0 %v366
  %v734 = vpop.f32.mrb[0].mxu0
  %v735 = vadd.f32 %v386, %v734
  %v736 = vpop.f32.mrb[0].mxu0
  %737 = vmatprep.mubr.f32.mxu0 %v369
  %738 = vmatmul.mubr.f32.gmra.mrb[0].mxu0 %v368
  %v739 = vpop.f32.mrb[0].mxu0
  %v740 = vadd.f32 %v386, %v739
  %v741 = vpop.f32.mrb[0].mxu0
  %742 = vmatprep.mubr.f32.mxu0 %v371
  %743 = vmatmul.mubr.f32.gmra.mrb[0].mxu0 %v370
  %v744 = vpop.f32.mrb[0].mxu0
  %v745 = vadd.f32 %v386, %v744
  %v746 = vpop.f32.mrb[0].mxu0
  %747 = vmatprep.mubr.f32.mxu0 %v373
  %748 = vmatmul.mubr.f32.gmra.mrb[0].mxu0 %v372
  %v749 = vpop.f32.mrb[0].mxu0
  %v750 = vadd.f32 %v386, %v749
  %v751 = vpop.f32.mrb[0].mxu0
  %752 = vmatprep.mubr.f32.mxu0 %v375
  %753 = vmatmul.mubr.f32.gmra.mrb[0].mxu0 %v374
  %v754 = vpop.f32.mrb[0].mxu0
  %v755 = vadd.f32 %v386, %v754
  %v756 = vpop.f32.mrb[0].mxu0
  %757 = vmatprep.mubr.f32.mxu0 %v377
  %758 = vmatmul.mubr.f32.gmra.mrb[0].mxu0 %v376
  %v759 = vpop.f32.mrb[0].mxu0
  %v760 = vadd.f32 %v386, %v759
  %v761 = vpop.f32.mrb[0].mxu0
  %762 = vmatprep.mubr.f32.mxu0 %v379
  %763 = vmatmul.mubr.f32.gmra.mrb[0].mxu0 %v378
  %v764 = vpop.f32.mrb[0].mxu0
  %v765 = vadd.f32 %v386, %v764
  %v766 = vpop.f32.mrb[0].mxu0
  %767 = vmatprep.mubr.f32.mxu0 %v381
  %768 = vmatmul.mubr.f32.gmra.mrb[0].mxu0 %v380
  %v769 = vpop.f32.mrb[0].mxu0
  %v770 = vadd.f32 %v386, %v769
  %v771 = vpop.f32.mrb[0].mxu0
  %772 = vdwg.mxu0
  %v773 = vmax.f32 %v455, 0.0
  %v774 = vmax.f32 %v460, 0.0
  %v775 = vmax.f32 %v465, 0.0
  %v776 = vmax.f32 %v470, 0.0
  %v777 = vmax.f32 %v475, 0.0
  %v778 = vmax.f32 %v480, 0.0
  %v779 = vmax.f32 %v485, 0.0
  %v780 = vmax.f32 %v490, 0.0
  %v781 = vmax.f32 %v495, 0.0
  %v782 = vmax.f32 %v500, 0.0
  %v783 = vmax.f32 %v505, 0.0
  %v784 = vmax.f32 %v510, 0.0
  %v785 = vmax.f32 %v515, 0.0
  %v786 = vmax.f32 %v520, 0.0
  %v787 = vmax.f32 %v525, 0.0
  %v788 = vmax.f32 %v530, 0.0
  %v789 = vmax.f32 %v535, 0.0
  %v790 = vmax.f32 %v540, 0.0
  %v791 = vmax.f32 %v545, 0.0
  %v792 = vmax.f32 %v550, 0.0
  %v793 = vmax.f32 %v555, 0.0
  %v794 = vmax.f32 %v560, 0.0
  %v795 = vmax.f32 %v565, 0.0
  %v796 = vmax.f32 %v570, 0.0
  %v797 = vmax.f32 %v575, 0.0
  %v798 = vmax.f32 %v580, 0.0
  %v799 = vmax.f32 %v585, 0.0
  %v800 = vmax.f32 %v590, 0.0
  %v801 = vmax.f32 %v595, 0.0
  %v802 = vmax.f32 %v600, 0.0
  %v803 = vmax.f32 %v605, 0.0
  %v804 = vmax.f32 %v610, 0.0
  %v805 = vmax.f32 %v615, 0.0
  %v806 = vmax.f32 %v620, 0.0
  %v807 = vmax.f32 %v625, 0.0
  %v808 = vmax.f32 %v630, 0.0
  %v809 = vmax.f32 %v635, 0.0
  %v810 = vmax.f32 %v640, 0.0
  %v811 = vmax.f32 %v645, 0.0
  %v812 = vmax.f32 %v650, 0.0
  %v813 = vmax.f32 %v655, 0.0
  %v814 = vmax.f32 %v660, 0.0
  %v815 = vmax.f32 %v665, 0.0
  %v816 = vmax.f32 %v670, 0.0
  %v817 = vmax.f32 %v675, 0.0
  %v818 = vmax.f32 %v680, 0.0
  %v819 = vmax.f32 %v685, 0.0
  %v820 = vmax.f32 %v690, 0.0
  %v821 = vmax.f32 %v695, 0.0
  %v822 = vmax.f32 %v700, 0.0
  %v823 = vmax.f32 %v705, 0.0
  %v824 = vmax.f32 %v710, 0.0
  %v825 = vmax.f32 %v715, 0.0
  %v826 = vmax.f32 %v720, 0.0
  %v827 = vmax.f32 %v725, 0.0
  %v828 = vmax.f32 %v730, 0.0
  %v829 = vmax.f32 %v735, 0.0
  %v830 = vmax.f32 %v740, 0.0
  %v831 = vmax.f32 %v745, 0.0
  %v832 = vmax.f32 %v750, 0.0
  %v833 = vmax.f32 %v755, 0.0
  %v834 = vmax.f32 %v760, 0.0
  %v835 = vmax.f32 %v765, 0.0
  %v836 = vmax.f32 %v770, 0.0
  %838 = vrot.lane.b32.xlu0 %v774, 32
  %v839 = vpop.permute.xlu0 %838
  %842 = vrot.lane.b32.xlu0 %v775, 64
  %v843 = vpop.permute.xlu0 %842
  %846 = vrot.lane.b32.xlu0 %v776, 96
  %v847 = vpop.permute.xlu0 %846
  %850 = vrot.lane.b32.xlu0 %v782, 32
  %v851 = vpop.permute.xlu0 %850
  %854 = vrot.lane.b32.xlu0 %v783, 64
  %v855 = vpop.permute.xlu0 %854
  %858 = vrot.lane.b32.xlu0 %v784, 96
  %v859 = vpop.permute.xlu0 %858
  %862 = vrot.lane.b32.xlu0 %v790, 32
  %v863 = vpop.permute.xlu0 %862
  %866 = vrot.lane.b32.xlu0 %v791, 64
  %v867 = vpop.permute.xlu0 %866
  %870 = vrot.lane.b32.xlu0 %v792, 96
  %v871 = vpop.permute.xlu0 %870
  %874 = vrot.lane.b32.xlu0 %v798, 32
  %v875 = vpop.permute.xlu0 %874
  %878 = vrot.lane.b32.xlu0 %v799, 64
  %v879 = vpop.permute.xlu0 %878
  %882 = vrot.lane.b32.xlu0 %v800, 96
  %v883 = vpop.permute.xlu0 %882
  %vm885 = vcmask 261120
  %v886 = vsel %vm885, %v773, %v839
  %vm887 = vcmask 523264
  %v888 = vsel %vm887, %v886, %v843
  %vm889 = vcmask 785408
  %v890 = vsel %vm889, %v888, %v847
  %v891 = vsel %vm885, %v781, %v851
  %v892 = vsel %vm887, %v891, %v855
  %v893 = vsel %vm889, %v892, %v859
  %v894 = vsel %vm885, %v789, %v863
  %v895 = vsel %vm887, %v894, %v867
  %v896 = vsel %vm889, %v895, %v871
  %v897 = vsel %vm885, %v797, %v875
  %v898 = vsel %vm887, %v897, %v879
  %v899 = vsel %vm889, %v898, %v883
  %900 = vrot.lane.b32.xlu0 %v776, 32
  %v901 = vpop.permute.xlu0 %900
  %904 = vrot.lane.b32.xlu0 %v777, 64
  %v905 = vpop.permute.xlu0 %904
  %908 = vrot.lane.b32.xlu0 %v778, 96
  %v909 = vpop.permute.xlu0 %908
  %911 = vrot.lane.b32.xlu0 %v784, 32
  %v912 = vpop.permute.xlu0 %911
  %915 = vrot.lane.b32.xlu0 %v785, 64
  %v916 = vpop.permute.xlu0 %915
  %919 = vrot.lane.b32.xlu0 %v786, 96
  %v920 = vpop.permute.xlu0 %919
  %922 = vrot.lane.b32.xlu0 %v792, 32
  %v923 = vpop.permute.xlu0 %922
  %926 = vrot.lane.b32.xlu0 %v793, 64
  %v927 = vpop.permute.xlu0 %926
  %930 = vrot.lane.b32.xlu0 %v794, 96
  %v931 = vpop.permute.xlu0 %930
  %933 = vrot.lane.b32.xlu0 %v800, 32
  %v934 = vpop.permute.xlu0 %933
  %937 = vrot.lane.b32.xlu0 %v801, 64
  %v938 = vpop.permute.xlu0 %937
  %941 = vrot.lane.b32.xlu0 %v802, 96
  %v942 = vpop.permute.xlu0 %941
  %v944 = vsel %vm885, %v775, %v901
  %v945 = vsel %vm887, %v944, %v905
  %v946 = vsel %vm889, %v945, %v909
  %v947 = vsel %vm885, %v783, %v912
  %v948 = vsel %vm887, %v947, %v916
  %v949 = vsel %vm889, %v948, %v920
  %v950 = vsel %vm885, %v791, %v923
  %v951 = vsel %vm887, %v950, %v927
  %v952 = vsel %vm889, %v951, %v931
  %v953 = vsel %vm885, %v799, %v934
  %v954 = vsel %vm887, %v953, %v938
  %v955 = vsel %vm889, %v954, %v942
  %956 = vrot.lane.b32.xlu0 %v778, 32
  %v957 = vpop.permute.xlu0 %956
  %960 = vrot.lane.b32.xlu0 %v779, 64
  %v961 = vpop.permute.xlu0 %960
  %964 = vrot.lane.b32.xlu0 %v780, 96
  %v965 = vpop.permute.xlu0 %964
  %967 = vrot.lane.b32.xlu0 %v786, 32
  %v968 = vpop.permute.xlu0 %967
  %971 = vrot.lane.b32.xlu0 %v787, 64
  %v972 = vpop.permute.xlu0 %971
  %975 = vrot.lane.b32.xlu0 %v788, 96
  %v976 = vpop.permute.xlu0 %975
  %978 = vrot.lane.b32.xlu0 %v794, 32
  %v979 = vpop.permute.xlu0 %978
  %982 = vrot.lane.b32.xlu0 %v795, 64
  %v983 = vpop.permute.xlu0 %982
  %986 = vrot.lane.b32.xlu0 %v796, 96
  %v987 = vpop.permute.xlu0 %986
  %989 = vrot.lane.b32.xlu0 %v802, 32
  %v990 = vpop.permute.xlu0 %989
  %993 = vrot.lane.b32.xlu0 %v803, 64
  %v994 = vpop.permute.xlu0 %993
  %997 = vrot.lane.b32.xlu0 %v804, 96
  %v998 = vpop.permute.xlu0 %997
  %v1000 = vsel %vm885, %v777, %v957
  %v1001 = vsel %vm887, %v1000, %v961
  %v1002 = vsel %vm889, %v1001, %v965
  %v1003 = vsel %vm885, %v785, %v968
  %v1004 = vsel %vm887, %v1003, %v972
  %v1005 = vsel %vm889, %v1004, %v976
  %v1006 = vsel %vm885, %v793, %v979
  %v1007 = vsel %vm887, %v1006, %v983
  %v1008 = vsel %vm889, %v1007, %v987
  %v1009 = vsel %vm885, %v801, %v990
  %v1010 = vsel %vm887, %v1009, %v994
  %v1011 = vsel %vm889, %v1010, %v998
  %1013 = vrot.lane.b32.xlu0 %v806, 32
  %v1014 = vpop.permute.xlu0 %1013
  %1017 = vrot.lane.b32.xlu0 %v807, 64
  %v1018 = vpop.permute.xlu0 %1017
  %1021 = vrot.lane.b32.xlu0 %v808, 96
  %v1022 = vpop.permute.xlu0 %1021
  %1025 = vrot.lane.b32.xlu0 %v814, 32
  %v1026 = vpop.permute.xlu0 %1025
  %1029 = vrot.lane.b32.xlu0 %v815, 64
  %v1030 = vpop.permute.xlu0 %1029
  %1033 = vrot.lane.b32.xlu0 %v816, 96
  %v1034 = vpop.permute.xlu0 %1033
  %v1036 = vsel %vm885, %v805, %v1014
  %v1037 = vsel %vm887, %v1036, %v1018
  %v1038 = vsel %vm889, %v1037, %v1022
  %v1039 = vsel %vm885, %v813, %v1026
  %v1040 = vsel %vm887, %v1039, %v1030
  %v1041 = vsel %vm889, %v1040, %v1034
  %1042 = vrot.lane.b32.xlu0 %v808, 32
  %v1043 = vpop.permute.xlu0 %1042
  %1046 = vrot.lane.b32.xlu0 %v809, 64
  %v1047 = vpop.permute.xlu0 %1046
  %1050 = vrot.lane.b32.xlu0 %v810, 96
  %v1051 = vpop.permute.xlu0 %1050
  %1053 = vrot.lane.b32.xlu0 %v816, 32
  %v1054 = vpop.permute.xlu0 %1053
  %1057 = vrot.lane.b32.xlu0 %v817, 64
  %v1058 = vpop.permute.xlu0 %1057
  %1061 = vrot.lane.b32.xlu0 %v818, 96
  %v1062 = vpop.permute.xlu0 %1061
  %v1064 = vsel %vm885, %v807, %v1043
  %v1065 = vsel %vm887, %v1064, %v1047
  %v1066 = vsel %vm889, %v1065, %v1051
  %v1067 = vsel %vm885, %v815, %v1054
  %v1068 = vsel %vm887, %v1067, %v1058
  %v1069 = vsel %vm889, %v1068, %v1062
  %1070 = vrot.lane.b32.xlu0 %v810, 32
  %v1071 = vpop.permute.xlu0 %1070
  %1074 = vrot.lane.b32.xlu0 %v811, 64
  %v1075 = vpop.permute.xlu0 %1074
  %1078 = vrot.lane.b32.xlu0 %v812, 96
  %v1079 = vpop.permute.xlu0 %1078
  %1081 = vrot.lane.b32.xlu0 %v818, 32
  %v1082 = vpop.permute.xlu0 %1081
  %1085 = vrot.lane.b32.xlu0 %v819, 64
  %v1086 = vpop.permute.xlu0 %1085
  %1089 = vrot.lane.b32.xlu0 %v820, 96
  %v1090 = vpop.permute.xlu0 %1089
  %v1092 = vsel %vm885, %v809, %v1071
  %v1093 = vsel %vm887, %v1092, %v1075
  %v1094 = vsel %vm889, %v1093, %v1079
  %v1095 = vsel %vm885, %v817, %v1082
  %v1096 = vsel %vm887, %v1095, %v1086
  %v1097 = vsel %vm889, %v1096, %v1090
  %1099 = vrot.lane.b32.xlu0 %v822, 32
  %v1100 = vpop.permute.xlu0 %1099
  %1103 = vrot.lane.b32.xlu0 %v823, 64
  %v1104 = vpop.permute.xlu0 %1103
  %1107 = vrot.lane.b32.xlu0 %v824, 96
  %v1108 = vpop.permute.xlu0 %1107
  %1111 = vrot.lane.b32.xlu0 %v830, 32
  %v1112 = vpop.permute.xlu0 %1111
  %1115 = vrot.lane.b32.xlu0 %v831, 64
  %v1116 = vpop.permute.xlu0 %1115
  %1119 = vrot.lane.b32.xlu0 %v832, 96
  %v1120 = vpop.permute.xlu0 %1119
  %v1122 = vsel %vm885, %v821, %v1100
  %v1123 = vsel %vm887, %v1122, %v1104
  %v1124 = vsel %vm889, %v1123, %v1108
  %v1125 = vsel %vm885, %v829, %v1112
  %v1126 = vsel %vm887, %v1125, %v1116
  %v1127 = vsel %vm889, %v1126, %v1120
  %1128 = vrot.lane.b32.xlu0 %v824, 32
  %v1129 = vpop.permute.xlu0 %1128
  %1132 = vrot.lane.b32.xlu0 %v825, 64
  %v1133 = vpop.permute.xlu0 %1132
  %1136 = vrot.lane.b32.xlu0 %v826, 96
  %v1137 = vpop.permute.xlu0 %1136
  %1139 = vrot.lane.b32.xlu0 %v832, 32
  %v1140 = vpop.permute.xlu0 %1139
  %1143 = vrot.lane.b32.xlu0 %v833, 64
  %v1144 = vpop.permute.xlu0 %1143
  %1147 = vrot.lane.b32.xlu0 %v834, 96
  %v1148 = vpop.permute.xlu0 %1147
  %v1150 = vsel %vm885, %v823, %v1129
  %v1151 = vsel %vm887, %v1150, %v1133
  %v1152 = vsel %vm889, %v1151, %v1137
  %v1153 = vsel %vm885, %v831, %v1140
  %v1154 = vsel %vm887, %v1153, %v1144
  %v1155 = vsel %vm889, %v1154, %v1148
  %1156 = vrot.lane.b32.xlu0 %v826, 32
  %v1157 = vpop.permute.xlu0 %1156
  %1160 = vrot.lane.b32.xlu0 %v827, 64
  %v1161 = vpop.permute.xlu0 %1160
  %1164 = vrot.lane.b32.xlu0 %v828, 96
  %v1165 = vpop.permute.xlu0 %1164
  %1167 = vrot.lane.b32.xlu0 %v834, 32
  %v1168 = vpop.permute.xlu0 %1167
  %1171 = vrot.lane.b32.xlu0 %v835, 64
  %v1172 = vpop.permute.xlu0 %1171
  %1175 = vrot.lane.b32.xlu0 %v836, 96
  %v1176 = vpop.permute.xlu0 %1175
  %v1178 = vsel %vm885, %v825, %v1157
  %v1179 = vsel %vm887, %v1178, %v1161
  %v1180 = vsel %vm889, %v1179, %v1165
  %v1181 = vsel %vm885, %v833, %v1168
  %v1182 = vsel %vm887, %v1181, %v1172
  %v1183 = vsel %vm889, %v1182, %v1176
  %v1185 = vlaneseq
  %v1186 = vshrl.u32 %v1185, 7
  %v1187 = vsub.s32 0, %v1186
  %v1188 = vrot.slane %v250, %v1187
  %1190 = vmatprep.subr.mxu0 0.0
  %1191 = vmatpush1.msra.mxu0 %v49
  %1192 = vmatprep.subr.mxu0 0.0
  %1193 = vmatpush1.msra.mxu0 %v50
  %1194 = vmatprep.subr.mxu0 0.0
  %1195 = vmatpush1.msra.mxu0 %v51
  %1196 = vmatprep.subr.mxu0 0.0
  %1197 = vmatpush1.msra.mxu0 %v52
  %1198 = vmatprep.subr.mxu0 0.0
  %1199 = vmatpush1.msra.mxu0 %v53
  %1200 = vmatprep.subr.mxu0 0.0
  %1201 = vmatpush1.msra.mxu0 %v54
  %1202 = vmatprep.subr.mxu0 0.0
  %1203 = vmatpush1.msra.mxu0 %v55
  %1204 = vmatprep.subr.mxu0 0.0
  %1205 = vmatpush1.msra.mxu0 %v56
  %1206 = vmatprep.subr.mxu0 0.0
  %1207 = vmatpush1.msra.mxu0 %v57
  %1208 = vmatprep.subr.mxu0 0.0
  %1209 = vmatpush1.msra.mxu0 %v58
  %1210 = vmatprep.subr.mxu0 0.0
  %1211 = vmatpush1.msra.mxu0 %v59
  %1212 = vmatprep.subr.mxu0 0.0
  %1213 = vmatpush1.msra.mxu0 %v60
  %1214 = vmatprep.subr.mxu0 0.0
  %1215 = vmatpush1.msra.mxu0 %v61
  %1216 = vmatprep.subr.mxu0 0.0
  %1217 = vmatpush1.msra.mxu0 %v62
  %1218 = vmatprep.subr.mxu0 0.0
  %1219 = vmatpush1.msra.mxu0 %v63
  %1220 = vmatprep.subr.mxu0 0.0
  %1221 = vmatpush1.msra.mxu0 %v64
  %1222 = vmatprep.subr.mxu0 0.0
  %1223 = vmatpush1.msra.mxu0 %v65
  %1224 = vmatprep.subr.mxu0 0.0
  %1225 = vmatpush1.msra.mxu0 %v66
  %1226 = vmatprep.subr.mxu0 0.0
  %1227 = vmatpush1.msra.mxu0 %v67
  %1228 = vmatprep.subr.mxu0 0.0
  %1229 = vmatpush1.msra.mxu0 %v68
  %1230 = vmatprep.subr.mxu0 0.0
  %1231 = vmatpush1.msra.mxu0 %v69
  %1232 = vmatprep.subr.mxu0 0.0
  %1233 = vmatpush1.msra.mxu0 %v70
  %1234 = vmatprep.subr.mxu0 0.0
  %1235 = vmatpush1.msra.mxu0 %v71
  %1236 = vmatprep.subr.mxu0 0.0
  %1237 = vmatpush1.msra.mxu0 %v72
  %1238 = vmatprep.subr.mxu0 0.0
  %1239 = vmatpush1.msra.mxu0 %v73
  %1240 = vmatprep.subr.mxu0 0.0
  %1241 = vmatpush1.msra.mxu0 %v74
  %1242 = vmatprep.subr.mxu0 0.0
  %1243 = vmatpush1.msra.mxu0 %v75
  %1244 = vmatprep.subr.mxu0 0.0
  %1245 = vmatpush1.msra.mxu0 %v76
  %1246 = vmatprep.subr.mxu0 0.0
  %1247 = vmatpush1.msra.mxu0 %v77
  %1248 = vmatprep.subr.mxu0 0.0
  %1249 = vmatpush1.msra.mxu0 %v78
  %1250 = vmatprep.subr.mxu0 0.0
  %1251 = vmatpush1.msra.mxu0 %v79
  %1252 = vmatprep.subr.mxu0 0.0
  %1253 = vmatpush1.msra.mxu0 %v80
  %1254 = vmatprep.mubr.f32.mxu0 %v893
  %1255 = vmatmul.mubr.f32.gmra.mrb[0].mxu0 %v890
  %v1256 = vpop.f32.mrb[0].mxu0
  %v1257 = vadd.f32 %v1188, %v1256
  %v1258 = vpop.f32.mrb[0].mxu0
  %1259 = vmatprep.mubr.f32.mxu0 %v949
  %1260 = vmatmul.mubr.f32.gmra.mrb[0].mxu0 %v946
  %v1261 = vpop.f32.mrb[0].mxu0
  %v1262 = vadd.f32 %v1188, %v1261
  %v1263 = vpop.f32.mrb[0].mxu0
  %1264 = vmatprep.mubr.f32.mxu0 %v1005
  %1265 = vmatmul.mubr.f32.gmra.mrb[0].mxu0 %v1002
  %v1266 = vpop.f32.mrb[0].mxu0
  %v1267 = vadd.f32 %v1188, %v1266
  %v1268 = vpop.f32.mrb[0].mxu0
  %1269 = vmatprep.mubr.f32.mxu0 %v899
  %1270 = vmatmul.mubr.f32.gmra.mrb[0].mxu0 %v896
  %v1271 = vpop.f32.mrb[0].mxu0
  %v1272 = vadd.f32 %v1188, %v1271
  %v1273 = vpop.f32.mrb[0].mxu0
  %1274 = vmatprep.mubr.f32.mxu0 %v955
  %1275 = vmatmul.mubr.f32.gmra.mrb[0].mxu0 %v952
  %v1276 = vpop.f32.mrb[0].mxu0
  %v1277 = vadd.f32 %v1188, %v1276
  %v1278 = vpop.f32.mrb[0].mxu0
  %1279 = vmatprep.mubr.f32.mxu0 %v1011
  %1280 = vmatmul.mubr.f32.gmra.mrb[0].mxu0 %v1008
  %v1281 = vpop.f32.mrb[0].mxu0
  %v1282 = vadd.f32 %v1188, %v1281
  %v1283 = vpop.f32.mrb[0].mxu0
  %1284 = vmatprep.mubr.f32.mxu0 %v1041
  %1285 = vmatmul.mubr.f32.gmra.mrb[0].mxu0 %v1038
  %v1286 = vpop.f32.mrb[0].mxu0
  %v1287 = vadd.f32 %v1188, %v1286
  %v1288 = vpop.f32.mrb[0].mxu0
  %1289 = vmatprep.mubr.f32.mxu0 %v1069
  %1290 = vmatmul.mubr.f32.gmra.mrb[0].mxu0 %v1066
  %v1291 = vpop.f32.mrb[0].mxu0
  %v1292 = vadd.f32 %v1188, %v1291
  %v1293 = vpop.f32.mrb[0].mxu0
  %1294 = vmatprep.mubr.f32.mxu0 %v1097
  %1295 = vmatmul.mubr.f32.gmra.mrb[0].mxu0 %v1094
  %v1296 = vpop.f32.mrb[0].mxu0
  %v1297 = vadd.f32 %v1188, %v1296
  %v1298 = vpop.f32.mrb[0].mxu0
  %1299 = vdwg.mxu0
  %1300 = vmatprep.subr.mxu0 0.0
  %1301 = vmatpush1.msra.mxu0 %v81
  %1302 = vmatprep.subr.mxu0 0.0
  %1303 = vmatpush1.msra.mxu0 %v82
  %1304 = vmatprep.subr.mxu0 0.0
  %1305 = vmatpush1.msra.mxu0 %v83
  %1306 = vmatprep.subr.mxu0 0.0
  %1307 = vmatpush1.msra.mxu0 %v84
  %1308 = vmatprep.subr.mxu0 0.0
  %1309 = vmatpush1.msra.mxu0 %v85
  %1310 = vmatprep.subr.mxu0 0.0
  %1311 = vmatpush1.msra.mxu0 %v86
  %1312 = vmatprep.subr.mxu0 0.0
  %1313 = vmatpush1.msra.mxu0 %v87
  %1314 = vmatprep.subr.mxu0 0.0
  %1315 = vmatpush1.msra.mxu0 %v88
  %1316 = vmatprep.subr.mxu0 0.0
  %1317 = vmatpush1.msra.mxu0 %v89
  %1318 = vmatprep.subr.mxu0 0.0
  %1319 = vmatpush1.msra.mxu0 %v90
  %1320 = vmatprep.subr.mxu0 0.0
  %1321 = vmatpush1.msra.mxu0 %v91
  %1322 = vmatprep.subr.mxu0 0.0
  %1323 = vmatpush1.msra.mxu0 %v92
  %1324 = vmatprep.subr.mxu0 0.0
  %1325 = vmatpush1.msra.mxu0 %v93
  %1326 = vmatprep.subr.mxu0 0.0
  %1327 = vmatpush1.msra.mxu0 %v94
  %1328 = vmatprep.subr.mxu0 0.0
  %1329 = vmatpush1.msra.mxu0 %v95
  %1330 = vmatprep.subr.mxu0 0.0
  %1331 = vmatpush1.msra.mxu0 %v96
  %1332 = vmatprep.subr.mxu0 0.0
  %1333 = vmatpush1.msra.mxu0 %v97
  %1334 = vmatprep.subr.mxu0 0.0
  %1335 = vmatpush1.msra.mxu0 %v98
  %1336 = vmatprep.subr.mxu0 0.0
  %1337 = vmatpush1.msra.mxu0 %v99
  %1338 = vmatprep.subr.mxu0 0.0
  %1339 = vmatpush1.msra.mxu0 %v100
  %1340 = vmatprep.subr.mxu0 0.0
  %1341 = vmatpush1.msra.mxu0 %v101
  %1342 = vmatprep.subr.mxu0 0.0
  %1343 = vmatpush1.msra.mxu0 %v102
  %1344 = vmatprep.subr.mxu0 0.0
  %1345 = vmatpush1.msra.mxu0 %v103
  %1346 = vmatprep.subr.mxu0 0.0
  %1347 = vmatpush1.msra.mxu0 %v104
  %1348 = vmatprep.subr.mxu0 0.0
  %1349 = vmatpush1.msra.mxu0 %v105
  %1350 = vmatprep.subr.mxu0 0.0
  %1351 = vmatpush1.msra.mxu0 %v106
  %1352 = vmatprep.subr.mxu0 0.0
  %1353 = vmatpush1.msra.mxu0 %v107
  %1354 = vmatprep.subr.mxu0 0.0
  %1355 = vmatpush1.msra.mxu0 %v108
  %1356 = vmatprep.subr.mxu0 0.0
  %1357 = vmatpush1.msra.mxu0 %v109
  %1358 = vmatprep.subr.mxu0 0.0
  %1359 = vmatpush1.msra.mxu0 %v110
  %1360 = vmatprep.subr.mxu0 0.0
  %1361 = vmatpush1.msra.mxu0 %v111
  %1362 = vmatprep.subr.mxu0 0.0
  %1363 = vmatpush1.msra.mxu0 %v112
  %1364 = vmatprep.mubr.f32.mxu0 %v899
  %1365 = vmatmul.mubr.f32.gmra.mrb[0].mxu0 %v896
  %v1366 = vpop.f32.mrb[0].mxu0
  %v1367 = vadd.f32 %v1257, %v1366
  %v1368 = vpop.f32.mrb[0].mxu0
  %1369 = vmatprep.mubr.f32.mxu0 %v955
  %1370 = vmatmul.mubr.f32.gmra.mrb[0].mxu0 %v952
  %v1371 = vpop.f32.mrb[0].mxu0
  %v1372 = vadd.f32 %v1262, %v1371
  %v1373 = vpop.f32.mrb[0].mxu0
  %1374 = vmatprep.mubr.f32.mxu0 %v1011
  %1375 = vmatmul.mubr.f32.gmra.mrb[0].mxu0 %v1008
  %v1376 = vpop.f32.mrb[0].mxu0
  %v1377 = vadd.f32 %v1267, %v1376
  %v1378 = vpop.f32.mrb[0].mxu0
  %1379 = vmatprep.mubr.f32.mxu0 %v1041
  %1380 = vmatmul.mubr.f32.gmra.mrb[0].mxu0 %v1038
  %v1381 = vpop.f32.mrb[0].mxu0
  %v1382 = vadd.f32 %v1272, %v1381
  %v1383 = vpop.f32.mrb[0].mxu0
  %1384 = vmatprep.mubr.f32.mxu0 %v1069
  %1385 = vmatmul.mubr.f32.gmra.mrb[0].mxu0 %v1066
  %v1386 = vpop.f32.mrb[0].mxu0
  %v1387 = vadd.f32 %v1277, %v1386
  %v1388 = vpop.f32.mrb[0].mxu0
  %1389 = vmatprep.mubr.f32.mxu0 %v1097
  %1390 = vmatmul.mubr.f32.gmra.mrb[0].mxu0 %v1094
  %v1391 = vpop.f32.mrb[0].mxu0
  %v1392 = vadd.f32 %v1282, %v1391
  %v1393 = vpop.f32.mrb[0].mxu0
  %1394 = vmatprep.mubr.f32.mxu0 %v1127
  %1395 = vmatmul.mubr.f32.gmra.mrb[0].mxu0 %v1124
  %v1396 = vpop.f32.mrb[0].mxu0
  %v1397 = vadd.f32 %v1287, %v1396
  %v1398 = vpop.f32.mrb[0].mxu0
  %1399 = vmatprep.mubr.f32.mxu0 %v1155
  %1400 = vmatmul.mubr.f32.gmra.mrb[0].mxu0 %v1152
  %v1401 = vpop.f32.mrb[0].mxu0
  %v1402 = vadd.f32 %v1292, %v1401
  %v1403 = vpop.f32.mrb[0].mxu0
  %1404 = vmatprep.mubr.f32.mxu0 %v1183
  %1405 = vmatmul.mubr.f32.gmra.mrb[0].mxu0 %v1180
  %v1406 = vpop.f32.mrb[0].mxu0
  %v1407 = vadd.f32 %v1297, %v1406
  %v1408 = vpop.f32.mrb[0].mxu0
  %1409 = vdwg.mxu0
  %v1410 = vmax.f32 %v1367, 0.0
  %v1411 = vmax.f32 %v1372, 0.0
  %v1412 = vmax.f32 %v1377, 0.0
  %v1413 = vmax.f32 %v1382, 0.0
  %v1414 = vmax.f32 %v1387, 0.0
  %v1415 = vmax.f32 %v1392, 0.0
  %v1416 = vmax.f32 %v1397, 0.0
  %v1417 = vmax.f32 %v1402, 0.0
  %v1418 = vmax.f32 %v1407, 0.0
  %1420 = vrot.lane.b32.xlu0 %v1411, 64
  %v1421 = vpop.permute.xlu0 %1420
  %1424 = vrot.lane.b32.xlu0 %v1413, 64
  %v1425 = vpop.permute.xlu0 %1424
  %1428 = vrot.lane.b32.xlu0 %v1415, 64
  %v1429 = vpop.permute.xlu0 %1428
  %1432 = vrot.lane.b32.xlu0 %v1417, 64
  %v1433 = vpop.permute.xlu0 %1432
  %v1435 = vsel %vm887, %v1410, %v1421
  %v1436 = vsel %vm887, %v1412, %v1425
  %v1437 = vsel %vm887, %v1414, %v1429
  %v1438 = vsel %vm887, %v1416, %v1433
  %v1440 = vlaneseq
  %v1441 = vshrl.u32 %v1440, 7
  %v1442 = vsub.s32 0, %v1441
  %v1443 = vrot.slane %v251, %v1442
  %v1446 = vsel %vm887, %v1418, 0
  %1448 = vmatprep.subr.mxu0 0.0
  %1449 = vmatpush1.msra.mxu0 %v113
  %1450 = vmatprep.subr.mxu0 0.0
  %1451 = vmatpush1.msra.mxu0 %v114
  %1452 = vmatprep.subr.mxu0 0.0
  %1453 = vmatpush1.msra.mxu0 %v115
  %1454 = vmatprep.subr.mxu0 0.0
  %1455 = vmatpush1.msra.mxu0 %v116
  %1456 = vmatprep.subr.mxu0 0.0
  %1457 = vmatpush1.msra.mxu0 %v117
  %1458 = vmatprep.subr.mxu0 0.0
  %1459 = vmatpush1.msra.mxu0 %v118
  %1460 = vmatprep.subr.mxu0 0.0
  %1461 = vmatpush1.msra.mxu0 %v119
  %1462 = vmatprep.subr.mxu0 0.0
  %1463 = vmatpush1.msra.mxu0 %v120
  %1464 = vmatprep.subr.mxu0 0.0
  %1465 = vmatpush1.msra.mxu0 %v121
  %1466 = vmatprep.subr.mxu0 0.0
  %1467 = vmatpush1.msra.mxu0 %v122
  %1468 = vmatprep.subr.mxu0 0.0
  %1469 = vmatpush1.msra.mxu0 %v123
  %1470 = vmatprep.subr.mxu0 0.0
  %1471 = vmatpush1.msra.mxu0 %v124
  %1472 = vmatprep.subr.mxu0 0.0
  %1473 = vmatpush1.msra.mxu0 %v125
  %1474 = vmatprep.subr.mxu0 0.0
  %1475 = vmatpush1.msra.mxu0 %v126
  %1476 = vmatprep.subr.mxu0 0.0
  %1477 = vmatpush1.msra.mxu0 %v127
  %1478 = vmatprep.subr.mxu0 0.0
  %1479 = vmatpush1.msra.mxu0 %v128
  %1480 = vmatprep.subr.mxu0 0.0
  %1481 = vmatpush1.msra.mxu0 %v129
  %1482 = vmatprep.subr.mxu0 0.0
  %1483 = vmatpush1.msra.mxu0 %v130
  %1484 = vmatprep.subr.mxu0 0.0
  %1485 = vmatpush1.msra.mxu0 %v131
  %1486 = vmatprep.subr.mxu0 0.0
  %1487 = vmatpush1.msra.mxu0 %v132
  %1488 = vmatprep.subr.mxu0 0.0
  %1489 = vmatpush1.msra.mxu0 %v133
  %1490 = vmatprep.subr.mxu0 0.0
  %1491 = vmatpush1.msra.mxu0 %v134
  %1492 = vmatprep.subr.mxu0 0.0
  %1493 = vmatpush1.msra.mxu0 %v135
  %1494 = vmatprep.subr.mxu0 0.0
  %1495 = vmatpush1.msra.mxu0 %v136
  %1496 = vmatprep.subr.mxu0 0.0
  %1497 = vmatpush1.msra.mxu0 %v137
  %1498 = vmatprep.subr.mxu0 0.0
  %1499 = vmatpush1.msra.mxu0 %v138
  %1500 = vmatprep.subr.mxu0 0.0
  %1501 = vmatpush1.msra.mxu0 %v139
  %1502 = vmatprep.subr.mxu0 0.0
  %1503 = vmatpush1.msra.mxu0 %v140
  %1504 = vmatprep.subr.mxu0 0.0
  %1505 = vmatpush1.msra.mxu0 %v141
  %1506 = vmatprep.subr.mxu0 0.0
  %1507 = vmatpush1.msra.mxu0 %v142
  %1508 = vmatprep.subr.mxu0 0.0
  %1509 = vmatpush1.msra.mxu0 %v143
  %1510 = vmatprep.subr.mxu0 0.0
  %1511 = vmatpush1.msra.mxu0 %v144
  %1512 = vmatprep.mubr.f32.mxu0 %v1436
  %1513 = vmatmul.mubr.f32.gmra.mrb[0].mxu0 %v1435
  %v1514 = vpop.f32.mrb[0].mxu0
  %v1515 = vadd.f32 %v1443, %v1514
  %v1516 = vpop.f32.mrb[0].mxu0
  %1517 = vdwg.mxu0
  %1518 = vmatprep.subr.mxu0 0.0
  %1519 = vmatpush1.msra.mxu0 %v145
  %1520 = vmatprep.subr.mxu0 0.0
  %1521 = vmatpush1.msra.mxu0 %v146
  %1522 = vmatprep.subr.mxu0 0.0
  %1523 = vmatpush1.msra.mxu0 %v147
  %1524 = vmatprep.subr.mxu0 0.0
  %1525 = vmatpush1.msra.mxu0 %v148
  %1526 = vmatprep.subr.mxu0 0.0
  %1527 = vmatpush1.msra.mxu0 %v149
  %1528 = vmatprep.subr.mxu0 0.0
  %1529 = vmatpush1.msra.mxu0 %v150
  %1530 = vmatprep.subr.mxu0 0.0
  %1531 = vmatpush1.msra.mxu0 %v151
  %1532 = vmatprep.subr.mxu0 0.0
  %1533 = vmatpush1.msra.mxu0 %v152
  %1534 = vmatprep.subr.mxu0 0.0
  %1535 = vmatpush1.msra.mxu0 %v153
  %1536 = vmatprep.subr.mxu0 0.0
  %1537 = vmatpush1.msra.mxu0 %v154
  %1538 = vmatprep.subr.mxu0 0.0
  %1539 = vmatpush1.msra.mxu0 %v155
  %1540 = vmatprep.subr.mxu0 0.0
  %1541 = vmatpush1.msra.mxu0 %v156
  %1542 = vmatprep.subr.mxu0 0.0
  %1543 = vmatpush1.msra.mxu0 %v157
  %1544 = vmatprep.subr.mxu0 0.0
  %1545 = vmatpush1.msra.mxu0 %v158
  %1546 = vmatprep.subr.mxu0 0.0
  %1547 = vmatpush1.msra.mxu0 %v159
  %1548 = vmatprep.subr.mxu0 0.0
  %1549 = vmatpush1.msra.mxu0 %v160
  %1550 = vmatprep.subr.mxu0 0.0
  %1551 = vmatpush1.msra.mxu0 %v161
  %1552 = vmatprep.subr.mxu0 0.0
  %1553 = vmatpush1.msra.mxu0 %v162
  %1554 = vmatprep.subr.mxu0 0.0
  %1555 = vmatpush1.msra.mxu0 %v163
  %1556 = vmatprep.subr.mxu0 0.0
  %1557 = vmatpush1.msra.mxu0 %v164
  %1558 = vmatprep.subr.mxu0 0.0
  %1559 = vmatpush1.msra.mxu0 %v165
  %1560 = vmatprep.subr.mxu0 0.0
  %1561 = vmatpush1.msra.mxu0 %v166
  %1562 = vmatprep.subr.mxu0 0.0
  %1563 = vmatpush1.msra.mxu0 %v167
  %1564 = vmatprep.subr.mxu0 0.0
  %1565 = vmatpush1.msra.mxu0 %v168
  %1566 = vmatprep.subr.mxu0 0.0
  %1567 = vmatpush1.msra.mxu0 %v169
  %1568 = vmatprep.subr.mxu0 0.0
  %1569 = vmatpush1.msra.mxu0 %v170
  %1570 = vmatprep.subr.mxu0 0.0
  %1571 = vmatpush1.msra.mxu0 %v171
  %1572 = vmatprep.subr.mxu0 0.0
  %1573 = vmatpush1.msra.mxu0 %v172
  %1574 = vmatprep.subr.mxu0 0.0
  %1575 = vmatpush1.msra.mxu0 %v173
  %1576 = vmatprep.subr.mxu0 0.0
  %1577 = vmatpush1.msra.mxu0 %v174
  %1578 = vmatprep.subr.mxu0 0.0
  %1579 = vmatpush1.msra.mxu0 %v175
  %1580 = vmatprep.subr.mxu0 0.0
  %1581 = vmatpush1.msra.mxu0 %v176
  %1582 = vmatprep.mubr.f32.mxu0 %v1438
  %1583 = vmatmul.mubr.f32.gmra.mrb[0].mxu0 %v1437
  %v1584 = vpop.f32.mrb[0].mxu0
  %v1585 = vadd.f32 %v1515, %v1584
  %v1586 = vpop.f32.mrb[0].mxu0
  %1587 = vdwg.mxu0
  %1588 = vmatprep.subr.mxu0 0.0
  %1589 = vmatpush1.msra.mxu0 %v177
  %1590 = vmatprep.subr.mxu0 0.0
  %1591 = vmatpush1.msra.mxu0 %v178
  %1592 = vmatprep.subr.mxu0 0.0
  %1593 = vmatpush1.msra.mxu0 %v179
  %1594 = vmatprep.subr.mxu0 0.0
  %1595 = vmatpush1.msra.mxu0 %v180
  %1596 = vmatprep.subr.mxu0 0.0
  %1597 = vmatpush1.msra.mxu0 %v181
  %1598 = vmatprep.subr.mxu0 0.0
  %1599 = vmatpush1.msra.mxu0 %v182
  %1600 = vmatprep.subr.mxu0 0.0
  %1601 = vmatpush1.msra.mxu0 %v183
  %1602 = vmatprep.subr.mxu0 0.0
  %1603 = vmatpush1.msra.mxu0 %v184
  %1604 = vmatprep.subr.mxu0 0.0
  %1605 = vmatpush1.msra.mxu0 0.0
  %1606 = vmatprep.subr.mxu0 0.0
  %1607 = vmatpush1.msra.mxu0 0.0
  %1608 = vmatprep.subr.mxu0 0.0
  %1609 = vmatpush1.msra.mxu0 0.0
  %1610 = vmatprep.subr.mxu0 0.0
  %1611 = vmatpush1.msra.mxu0 0.0
  %1612 = vmatprep.subr.mxu0 0.0
  %1613 = vmatpush1.msra.mxu0 0.0
  %1614 = vmatprep.subr.mxu0 0.0
  %1615 = vmatpush1.msra.mxu0 0.0
  %1616 = vmatprep.subr.mxu0 0.0
  %1617 = vmatpush1.msra.mxu0 0.0
  %1618 = vmatprep.subr.mxu0 0.0
  %1619 = vmatpush1.msra.mxu0 0.0
  %1620 = vmatprep.subr.mxu0 0.0
  %1621 = vmatpush1.msra.mxu0 0.0
  %1622 = vmatprep.subr.mxu0 0.0
  %1623 = vmatpush1.msra.mxu0 0.0
  %1624 = vmatprep.subr.mxu0 0.0
  %1625 = vmatpush1.msra.mxu0 0.0
  %1626 = vmatprep.subr.mxu0 0.0
  %1627 = vmatpush1.msra.mxu0 0.0
  %1628 = vmatprep.subr.mxu0 0.0
  %1629 = vmatpush1.msra.mxu0 0.0
  %1630 = vmatprep.subr.mxu0 0.0
  %1631 = vmatpush1.msra.mxu0 0.0
  %1632 = vmatprep.subr.mxu0 0.0
  %1633 = vmatpush1.msra.mxu0 0.0
  %1634 = vmatprep.subr.mxu0 0.0
  %1635 = vmatpush1.msra.mxu0 0.0
  %1636 = vmatprep.subr.mxu0 0.0
  %1637 = vmatpush1.msra.mxu0 0.0
  %1638 = vmatprep.subr.mxu0 0.0
  %1639 = vmatpush1.msra.mxu0 0.0
  %1640 = vmatprep.subr.mxu0 0.0
  %1641 = vmatpush1.msra.mxu0 0.0
  %1642 = vmatprep.subr.mxu0 0.0
  %1643 = vmatpush1.msra.mxu0 0.0
  %1644 = vmatprep.subr.mxu0 0.0
  %1645 = vmatpush1.msra.mxu0 0.0
  %1646 = vmatprep.subr.mxu0 0.0
  %1647 = vmatpush1.msra.mxu0 0.0
  %1648 = vmatprep.subr.mxu0 0.0
  %1649 = vmatpush1.msra.mxu0 0.0
  %1650 = vmatprep.subr.mxu0 0.0
  %1651 = vmatpush1.msra.mxu0 0.0
  %1652 = vmatprep.mubr.f32.mxu0 0.0
  %1653 = vmatmul.mubr.f32.gmra.mrb[0].mxu0 %v1446
  %v1654 = vpop.f32.mrb[0].mxu0
  %v1655 = vadd.f32 %v1585, %v1654
  %v1656 = vpop.f32.mrb[0].mxu0
  %1657 = vdwg.mxu0
  %v1658 = vmax.f32 %v1655, 0.0
  %v1659 = vld [vmem:[%s2] sm:$0xff]
  %v1660 = vld [vmem:[%s2 + $0x8] sm:$0xff]
  %v1661 = vld [vmem:[%s2 + $0x10] sm:$0xff]
  %v1662 = vld [vmem:[%s2 + $0x18] sm:$0xff]
  %v1663 = vld [vmem:[%s2 + $0x20] sm:$0xff]
  %v1664 = vld [vmem:[%s2 + $0x28] sm:$0xff]
  %v1665 = vld [vmem:[%s2 + $0x30] sm:$0xff]
  %v1666 = vld [vmem:[%s2 + $0x38] sm:$0xff]
  %v1667 = vld [vmem:[%s2 + $0x40] sm:$0xff]
  %v1668 = vld [vmem:[%s2 + $0x48] sm:$0xff]
  %v1669 = vld [vmem:[%s2 + $0x50] sm:$0xff]
  %v1670 = vld [vmem:[%s2 + $0x58] sm:$0xff]
  %v1671 = vld [vmem:[%s2 + $0x60] sm:$0xff]
  %v1672 = vld [vmem:[%s2 + $0x68] sm:$0xff]
  %v1673 = vld [vmem:[%s2 + $0x70] sm:$0xff]
  %v1674 = vld [vmem:[%s2 + $0x78] sm:$0xff]
  %v1675 = vld [vmem:[%s2 + $0x80] sm:$0xff]
  %v1676 = vld [vmem:[%s2 + $0x88] sm:$0xff]
  %v1677 = vld [vmem:[%s2 + $0x90] sm:$0xff]
  %v1678 = vld [vmem:[%s2 + $0x98] sm:$0xff]
  %v1679 = vld [vmem:[%s2 + $0xa0] sm:$0xff]
  %v1680 = vld [vmem:[%s2 + $0xa8] sm:$0xff]
  %v1681 = vld [vmem:[%s2 + $0xb0] sm:$0xff]
  %v1682 = vld [vmem:[%s2 + $0xb8] sm:$0xff]
  %v1683 = vld [vmem:[%s2 + $0xc0] sm:$0xff]
  %v1684 = vld [vmem:[%s2 + $0xc8] sm:$0xff]
  %v1685 = vld [vmem:[%s2 + $0xd0] sm:$0xff]
  %v1686 = vld [vmem:[%s2 + $0xd8] sm:$0xff]
  %v1687 = vld [vmem:[%s2 + $0xe0] sm:$0xff]
  %v1688 = vld [vmem:[%s2 + $0xe8] sm:$0xff]
  %v1689 = vld [vmem:[%s2 + $0xf0] sm:$0xff]
  %v1690 = vld [vmem:[%s2 + $0xf8] sm:$0xff]
  %v1692 = vlaneseq
  %v1693 = vshrl.u32 %v1692, 7
  %v1694 = vsub.s32 0, %v1693
  %v1695 = vrot.slane %v252, %v1694
  %v1696 = vlaneseq
  %v1697 = vshrl.u32 %v1696, 7
  %v1698 = vsub.s32 1, %v1697
  %v1699 = vrot.slane %v252, %v1698
  %v1700 = vlaneseq
  %v1701 = vshrl.u32 %v1700, 7
  %v1702 = vsub.s32 2, %v1701
  %v1703 = vrot.slane %v252, %v1702
  %v1704 = vlaneseq
  %v1705 = vshrl.u32 %v1704, 7
  %v1706 = vsub.s32 3, %v1705
  %v1707 = vrot.slane %v252, %v1706
  %v1713 = vsel %vm887, %v1658, 0
  %1715 = vmatprep.subr.mxu0 %v1660
  %1716 = vmatpush1.msra.mxu0 %v1659
  %1717 = vmatprep.subr.mxu0 %v1664
  %1718 = vmatpush1.msra.mxu0 %v1663
  %1719 = vmatprep.subr.mxu0 %v1668
  %1720 = vmatpush1.msra.mxu0 %v1667
  %1721 = vmatprep.subr.mxu0 %v1672
  %1722 = vmatpush1.msra.mxu0 %v1671
  %1723 = vmatprep.subr.mxu0 %v1676
  %1724 = vmatpush1.msra.mxu0 %v1675
  %1725 = vmatprep.subr.mxu0 %v1680
  %1726 = vmatpush1.msra.mxu0 %v1679
  %1727 = vmatprep.subr.mxu0 %v1684
  %1728 = vmatpush1.msra.mxu0 %v1683
  %1729 = vmatprep.subr.mxu0 %v1688
  %1730 = vmatpush1.msra.mxu0 %v1687
  %1731 = vmatprep.subr.mxu0 0.0
  %1732 = vmatpush1.msra.mxu0 0.0
  %1733 = vmatprep.subr.mxu0 0.0
  %1734 = vmatpush1.msra.mxu0 0.0
  %1735 = vmatprep.subr.mxu0 0.0
  %1736 = vmatpush1.msra.mxu0 0.0
  %1737 = vmatprep.subr.mxu0 0.0
  %1738 = vmatpush1.msra.mxu0 0.0
  %1739 = vmatprep.subr.mxu0 0.0
  %1740 = vmatpush1.msra.mxu0 0.0
  %1741 = vmatprep.subr.mxu0 0.0
  %1742 = vmatpush1.msra.mxu0 0.0
  %1743 = vmatprep.subr.mxu0 0.0
  %1744 = vmatpush1.msra.mxu0 0.0
  %1745 = vmatprep.subr.mxu0 0.0
  %1746 = vmatpush1.msra.mxu0 0.0
  %1747 = vmatprep.subr.mxu0 0.0
  %1748 = vmatpush1.msra.mxu0 0.0
  %1749 = vmatprep.subr.mxu0 0.0
  %1750 = vmatpush1.msra.mxu0 0.0
  %1751 = vmatprep.subr.mxu0 0.0
  %1752 = vmatpush1.msra.mxu0 0.0
  %1753 = vmatprep.subr.mxu0 0.0
  %1754 = vmatpush1.msra.mxu0 0.0
  %1755 = vmatprep.subr.mxu0 0.0
  %1756 = vmatpush1.msra.mxu0 0.0
  %1757 = vmatprep.subr.mxu0 0.0
  %1758 = vmatpush1.msra.mxu0 0.0
  %1759 = vmatprep.subr.mxu0 0.0
  %1760 = vmatpush1.msra.mxu0 0.0
  %1761 = vmatprep.subr.mxu0 0.0
  %1762 = vmatpush1.msra.mxu0 0.0
  %1763 = vmatprep.subr.mxu0 0.0
  %1764 = vmatpush1.msra.mxu0 0.0
  %1765 = vmatprep.subr.mxu0 0.0
  %1766 = vmatpush1.msra.mxu0 0.0
  %1767 = vmatprep.subr.mxu0 0.0
  %1768 = vmatpush1.msra.mxu0 0.0
  %1769 = vmatprep.subr.mxu0 0.0
  %1770 = vmatpush1.msra.mxu0 0.0
  %1771 = vmatprep.subr.mxu0 0.0
  %1772 = vmatpush1.msra.mxu0 0.0
  %1773 = vmatprep.subr.mxu0 0.0
  %1774 = vmatpush1.msra.mxu0 0.0
  %1775 = vmatprep.subr.mxu0 0.0
  %1776 = vmatpush1.msra.mxu0 0.0
  %1777 = vmatprep.subr.mxu0 0.0
  %1778 = vmatpush1.msra.mxu0 0.0
  %1779 = vmatprep.mubr.f32.mxu0 0.0
  %1780 = vmatmul.mubr.f32.gmra.mrb[0].mxu0 %v1713
  %v1781 = vpop.f32.mrb[0].mxu0
  %v1782 = vadd.f32 %v1695, %v1781
  %v1783 = vpop.f32.mrb[0].mxu0
  %v1784 = vadd.f32 %v1699, %v1783
  %1785 = vdwg.mxu0
  %1786 = vmatprep.subr.mxu0 %v1662
  %1787 = vmatpush1.msra.mxu0 %v1661
  %1788 = vmatprep.subr.mxu0 %v1666
  %1789 = vmatpush1.msra.mxu0 %v1665
  %1790 = vmatprep.subr.mxu0 %v1670
  %1791 = vmatpush1.msra.mxu0 %v1669
  %1792 = vmatprep.subr.mxu0 %v1674
  %1793 = vmatpush1.msra.mxu0 %v1673
  %1794 = vmatprep.subr.mxu0 %v1678
  %1795 = vmatpush1.msra.mxu0 %v1677
  %1796 = vmatprep.subr.mxu0 %v1682
  %1797 = vmatpush1.msra.mxu0 %v1681
  %1798 = vmatprep.subr.mxu0 %v1686
  %1799 = vmatpush1.msra.mxu0 %v1685
  %1800 = vmatprep.subr.mxu0 %v1690
  %1801 = vmatpush1.msra.mxu0 %v1689
  %1802 = vmatprep.subr.mxu0 0.0
  %1803 = vmatpush1.msra.mxu0 0.0
  %1804 = vmatprep.subr.mxu0 0.0
  %1805 = vmatpush1.msra.mxu0 0.0
  %1806 = vmatprep.subr.mxu0 0.0
  %1807 = vmatpush1.msra.mxu0 0.0
  %1808 = vmatprep.subr.mxu0 0.0
  %1809 = vmatpush1.msra.mxu0 0.0
  %1810 = vmatprep.subr.mxu0 0.0
  %1811 = vmatpush1.msra.mxu0 0.0
  %1812 = vmatprep.subr.mxu0 0.0
  %1813 = vmatpush1.msra.mxu0 0.0
  %1814 = vmatprep.subr.mxu0 0.0
  %1815 = vmatpush1.msra.mxu0 0.0
  %1816 = vmatprep.subr.mxu0 0.0
  %1817 = vmatpush1.msra.mxu0 0.0
  %1818 = vmatprep.subr.mxu0 0.0
  %1819 = vmatpush1.msra.mxu0 0.0
  %1820 = vmatprep.subr.mxu0 0.0
  %1821 = vmatpush1.msra.mxu0 0.0
  %1822 = vmatprep.subr.mxu0 0.0
  %1823 = vmatpush1.msra.mxu0 0.0
  %1824 = vmatprep.subr.mxu0 0.0
  %1825 = vmatpush1.msra.mxu0 0.0
  %1826 = vmatprep.subr.mxu0 0.0
  %1827 = vmatpush1.msra.mxu0 0.0
  %1828 = vmatprep.subr.mxu0 0.0
  %1829 = vmatpush1.msra.mxu0 0.0
  %1830 = vmatprep.subr.mxu0 0.0
  %1831 = vmatpush1.msra.mxu0 0.0
  %1832 = vmatprep.subr.mxu0 0.0
  %1833 = vmatpush1.msra.mxu0 0.0
  %1834 = vmatprep.subr.mxu0 0.0
  %1835 = vmatpush1.msra.mxu0 0.0
  %1836 = vmatprep.subr.mxu0 0.0
  %1837 = vmatpush1.msra.mxu0 0.0
  %1838 = vmatprep.subr.mxu0 0.0
  %1839 = vmatpush1.msra.mxu0 0.0
  %1840 = vmatprep.subr.mxu0 0.0
  %1841 = vmatpush1.msra.mxu0 0.0
  %1842 = vmatprep.subr.mxu0 0.0
  %1843 = vmatpush1.msra.mxu0 0.0
  %1844 = vmatprep.subr.mxu0 0.0
  %1845 = vmatpush1.msra.mxu0 0.0
  %1846 = vmatprep.subr.mxu0 0.0
  %1847 = vmatpush1.msra.mxu0 0.0
  %1848 = vmatprep.subr.mxu0 0.0
  %1849 = vmatpush1.msra.mxu0 0.0
  %1850 = vmatprep.mubr.f32.mxu0 0.0
  %1851 = vmatmul.mubr.f32.gmra.mrb[0].mxu0 %v1713
  %v1852 = vpop.f32.mrb[0].mxu0
  %v1853 = vadd.f32 %v1703, %v1852
  %v1854 = vpop.f32.mrb[0].mxu0
  %v1855 = vadd.f32 %v1707, %v1854
  %1856 = vdwg.mxu0
  %v1857 = vmax.f32 %v1782, 0.0
  %v1858 = vmax.f32 %v1784, 0.0
  %v1859 = vmax.f32 %v1853, 0.0
  %v1860 = vmax.f32 %v1855, 0.0
  %v1862 = vlaneseq
  %v1863 = vshrl.u32 %v1862, 7
  %v1864 = vsub.s32 0, %v1863
  %v1865 = vrot.slane %v253, %v1864
  %1867 = vmatprep.subr.mxu0 0.0
  %1868 = vmatpush1.msra.mxu0 %v185
  %1869 = vmatprep.subr.mxu0 0.0
  %1870 = vmatpush1.msra.mxu0 %v186
  %1871 = vmatprep.subr.mxu0 0.0
  %1872 = vmatpush1.msra.mxu0 %v187
  %1873 = vmatprep.subr.mxu0 0.0
  %1874 = vmatpush1.msra.mxu0 %v188
  %1875 = vmatprep.subr.mxu0 0.0
  %1876 = vmatpush1.msra.mxu0 %v189
  %1877 = vmatprep.subr.mxu0 0.0
  %1878 = vmatpush1.msra.mxu0 %v190
  %1879 = vmatprep.subr.mxu0 0.0
  %1880 = vmatpush1.msra.mxu0 %v191
  %1881 = vmatprep.subr.mxu0 0.0
  %1882 = vmatpush1.msra.mxu0 %v192
  %1883 = vmatprep.subr.mxu0 0.0
  %1884 = vmatpush1.msra.mxu0 %v193
  %1885 = vmatprep.subr.mxu0 0.0
  %1886 = vmatpush1.msra.mxu0 %v194
  %1887 = vmatprep.subr.mxu0 0.0
  %1888 = vmatpush1.msra.mxu0 %v195
  %1889 = vmatprep.subr.mxu0 0.0
  %1890 = vmatpush1.msra.mxu0 %v196
  %1891 = vmatprep.subr.mxu0 0.0
  %1892 = vmatpush1.msra.mxu0 %v197
  %1893 = vmatprep.subr.mxu0 0.0
  %1894 = vmatpush1.msra.mxu0 %v198
  %1895 = vmatprep.subr.mxu0 0.0
  %1896 = vmatpush1.msra.mxu0 %v199
  %1897 = vmatprep.subr.mxu0 0.0
  %1898 = vmatpush1.msra.mxu0 %v200
  %1899 = vmatprep.subr.mxu0 0.0
  %1900 = vmatpush1.msra.mxu0 %v201
  %1901 = vmatprep.subr.mxu0 0.0
  %1902 = vmatpush1.msra.mxu0 %v202
  %1903 = vmatprep.subr.mxu0 0.0
  %1904 = vmatpush1.msra.mxu0 %v203
  %1905 = vmatprep.subr.mxu0 0.0
  %1906 = vmatpush1.msra.mxu0 %v204
  %1907 = vmatprep.subr.mxu0 0.0
  %1908 = vmatpush1.msra.mxu0 %v205
  %1909 = vmatprep.subr.mxu0 0.0
  %1910 = vmatpush1.msra.mxu0 %v206
  %1911 = vmatprep.subr.mxu0 0.0
  %1912 = vmatpush1.msra.mxu0 %v207
  %1913 = vmatprep.subr.mxu0 0.0
  %1914 = vmatpush1.msra.mxu0 %v208
  %1915 = vmatprep.subr.mxu0 0.0
  %1916 = vmatpush1.msra.mxu0 %v209
  %1917 = vmatprep.subr.mxu0 0.0
  %1918 = vmatpush1.msra.mxu0 %v210
  %1919 = vmatprep.subr.mxu0 0.0
  %1920 = vmatpush1.msra.mxu0 %v211
  %1921 = vmatprep.subr.mxu0 0.0
  %1922 = vmatpush1.msra.mxu0 %v212
  %1923 = vmatprep.subr.mxu0 0.0
  %1924 = vmatpush1.msra.mxu0 %v213
  %1925 = vmatprep.subr.mxu0 0.0
  %1926 = vmatpush1.msra.mxu0 %v214
  %1927 = vmatprep.subr.mxu0 0.0
  %1928 = vmatpush1.msra.mxu0 %v215
  %1929 = vmatprep.subr.mxu0 0.0
  %1930 = vmatpush1.msra.mxu0 %v216
  %1931 = vmatprep.mubr.f32.mxu0 %v1858
  %1932 = vmatmul.mubr.f32.gmra.mrb[0].mxu0 %v1857
  %v1933 = vpop.f32.mrb[0].mxu0
  %v1934 = vadd.f32 %v1865, %v1933
  %v1935 = vpop.f32.mrb[0].mxu0
  %1936 = vdwg.mxu0
  %1937 = vmatprep.subr.mxu0 0.0
  %1938 = vmatpush1.msra.mxu0 %v217
  %1939 = vmatprep.subr.mxu0 0.0
  %1940 = vmatpush1.msra.mxu0 %v218
  %1941 = vmatprep.subr.mxu0 0.0
  %1942 = vmatpush1.msra.mxu0 %v219
  %1943 = vmatprep.subr.mxu0 0.0
  %1944 = vmatpush1.msra.mxu0 %v220
  %1945 = vmatprep.subr.mxu0 0.0
  %1946 = vmatpush1.msra.mxu0 %v221
  %1947 = vmatprep.subr.mxu0 0.0
  %1948 = vmatpush1.msra.mxu0 %v222
  %1949 = vmatprep.subr.mxu0 0.0
  %1950 = vmatpush1.msra.mxu0 %v223
  %1951 = vmatprep.subr.mxu0 0.0
  %1952 = vmatpush1.msra.mxu0 %v224
  %1953 = vmatprep.subr.mxu0 0.0
  %1954 = vmatpush1.msra.mxu0 %v225
  %1955 = vmatprep.subr.mxu0 0.0
  %1956 = vmatpush1.msra.mxu0 %v226
  %1957 = vmatprep.subr.mxu0 0.0
  %1958 = vmatpush1.msra.mxu0 %v227
  %1959 = vmatprep.subr.mxu0 0.0
  %1960 = vmatpush1.msra.mxu0 %v228
  %1961 = vmatprep.subr.mxu0 0.0
  %1962 = vmatpush1.msra.mxu0 %v229
  %1963 = vmatprep.subr.mxu0 0.0
  %1964 = vmatpush1.msra.mxu0 %v230
  %1965 = vmatprep.subr.mxu0 0.0
  %1966 = vmatpush1.msra.mxu0 %v231
  %1967 = vmatprep.subr.mxu0 0.0
  %1968 = vmatpush1.msra.mxu0 %v232
  %1969 = vmatprep.subr.mxu0 0.0
  %1970 = vmatpush1.msra.mxu0 %v233
  %1971 = vmatprep.subr.mxu0 0.0
  %1972 = vmatpush1.msra.mxu0 %v234
  %1973 = vmatprep.subr.mxu0 0.0
  %1974 = vmatpush1.msra.mxu0 %v235
  %1975 = vmatprep.subr.mxu0 0.0
  %1976 = vmatpush1.msra.mxu0 %v236
  %1977 = vmatprep.subr.mxu0 0.0
  %1978 = vmatpush1.msra.mxu0 %v237
  %1979 = vmatprep.subr.mxu0 0.0
  %1980 = vmatpush1.msra.mxu0 %v238
  %1981 = vmatprep.subr.mxu0 0.0
  %1982 = vmatpush1.msra.mxu0 %v239
  %1983 = vmatprep.subr.mxu0 0.0
  %1984 = vmatpush1.msra.mxu0 %v240
  %1985 = vmatprep.subr.mxu0 0.0
  %1986 = vmatpush1.msra.mxu0 %v241
  %1987 = vmatprep.subr.mxu0 0.0
  %1988 = vmatpush1.msra.mxu0 %v242
  %1989 = vmatprep.subr.mxu0 0.0
  %1990 = vmatpush1.msra.mxu0 %v243
  %1991 = vmatprep.subr.mxu0 0.0
  %1992 = vmatpush1.msra.mxu0 %v244
  %1993 = vmatprep.subr.mxu0 0.0
  %1994 = vmatpush1.msra.mxu0 %v245
  %1995 = vmatprep.subr.mxu0 0.0
  %1996 = vmatpush1.msra.mxu0 %v246
  %1997 = vmatprep.subr.mxu0 0.0
  %1998 = vmatpush1.msra.mxu0 %v247
  %1999 = vmatprep.subr.mxu0 0.0
  %2000 = vmatpush1.msra.mxu0 %v248
  %2001 = vmatprep.mubr.f32.mxu0 %v1860
  %2002 = vmatmul.mubr.f32.gmra.mrb[0].mxu0 %v1859
  %v2003 = vpop.f32.mrb[0].mxu0
  %v2004 = vadd.f32 %v1934, %v2003
  %v2005 = vpop.f32.mrb[0].mxu0
  %2006 = vdwg.mxu0
  %2007 = vst [vmem:[%s4] sm:$0xff] %v2004
  // Predicated region
  $region18: #{forward.1} parent=0 // pred_check
    _
  $region19: #{forward.1} parent=0 // pred_check_branch
    %2009 = sbr.rel (0) target = $region21
  $region20: #{forward.1} parent=0 // pred_region
    _
  $region21: #{forward.1} parent=0 // pred_fallthru
    _
  // Predicated region
  $region22: #{forward.1} parent=0 // pred_check
    _
  $region23: #{forward.1} parent=0 // pred_check_branch
    %2011 = sbr.rel (0) target = $region25
  $region24: #{forward.1} parent=0 // pred_region
    _
  $region25: #{forward.1} parent=0 // pred_fallthru
    _

</llo_original>
